<compile_context>
chip_gen: v7x
topology: tpu7x:2x2x1
jax: 0.10.0
libtpu: 0.0.40
codegen_flags: <defaults>
</compile_context>

<pallas_src>
import math

import jax
import jax.numpy as jnp
from jax.experimental import pallas as pl
from jax.experimental.pallas import tpu as pltpu


# ----------------------------- model config ---------------------------------
BATCH = 2
MAX_LEN = 8            # bert_max_len
HIDDEN = 16            # bert_hidden_units
NUM_HEADS = 2          # bert_num_heads
N_LAYERS = 2           # bert_num_blocks
NUM_ITEMS = 20
NUM_AUTHOR = 10
HIDDEN_SUM = HIDDEN * 2            # concat aggregation with author embeddings
FFN = HIDDEN_SUM * 4
DK = HIDDEN_SUM // NUM_HEADS
LN_EPS = 1e-6
ATTN_SCALE = 1.0 / math.sqrt(DK)

# stacked embedding-table layout (token rows | author rows | positional rows)
VT = NUM_ITEMS + 2
VA = NUM_AUTHOR + 2
VT_PAD = ((VT + 7) // 8) * 8       # 24
VA_PAD = ((VA + 7) // 8) * 8       # 16
POS_OFF = VT_PAD + VA_PAD          # 40
EMB_ROWS = POS_OFF + MAX_LEN       # 48

MAX_TILE_ROWS = 256                # sublane rows per grid step (whole sequences)


# --------------------------- Pallas kernel ----------------------------------
def _fast_recip(d):
    # EUP approximate reciprocal + one Newton-Raphson step: avoids a VALU divide
    # while keeping ~f32 accuracy for the correctness check.
    r = pl.reciprocal(d, approx=True)
    return r * (2.0 - d * r)


def bert_fused_kernel(ints_ref, coltag_ref, emb_ref, wsq_ref, wffn_ref,
                      b32_ref, b128_ref, out_ref):
    f32 = jnp.float32
    TBL = ints_ref.shape[0]        # rows in this batch tile (whole sequences)
    H = HIDDEN_SUM
    VTOT = emb_ref.shape[0]

    # ---- fused embedding gather: ONE one-hot matmul against the stacked table
    # (token | author | positional rows).  Row 0 of the token / author regions
    # is zero, so pad tokens contribute only the positional term, exactly like
    # nn.Embedding(padding_idx=0) + PositionalEmbedding.
    ints = ints_ref[...]                               # (TBL, 4) int32
    tok_id = ints[:, 0:1]
    auth_id = ints[:, 1:2]                             # already offset by VT_PAD
    pos_id = ints[:, 2:3]                              # already offset by POS_OFF
    row_tag = ints[:, 3:4]

    lane_v = jax.lax.broadcasted_iota(jnp.int32, (TBL, VTOT), 1)
    onehot = ((lane_v == tok_id) | (lane_v == auth_id)
              | (lane_v == pos_id)).astype(f32)        # 3 ones per row
    x = jnp.dot(onehot, emb_ref[...], preferred_element_type=f32)   # (TBL, H)

    # ---- additive attention bias, built once per tile, reused everywhere -----
    # allowed(i, j)  <=>  same sequence AND key j is a non-pad token.
    attn_bias = jnp.where(row_tag == coltag_ref[...], 0.0, -1e9).astype(f32)

    # ---- static per-head lane masks (no lane slices, no concatenate) ---------
    lane_h = jax.lax.broadcasted_iota(jnp.int32, (1, H), 1)
    head_masks = [jnp.logical_and(lane_h >= h * DK, lane_h < (h + 1) * DK)
                  for h in range(NUM_HEADS)]

    def layer_norm(v, g, b):
        # BERT4Rec LayerNorm: unbiased std (ddof = 1), eps added to std (not var).
        mean = jnp.mean(v, axis=-1, keepdims=True)
        diff = v - mean
        var = jnp.sum(diff * diff, axis=-1, keepdims=True) * (1.0 / (H - 1))
        return g * diff * _fast_recip(jnp.sqrt(var) + LN_EPS) + b

    def gelu(v):
        # tanh-approximation GELU (as in BERT4Rec's GELU module)
        return 0.5 * v * (1.0 + jnp.tanh(
            math.sqrt(2.0 / math.pi) * (v + 0.044715 * v * v * v)))

    # ---- all transformer blocks, statically unrolled, weights from slabs -----
    n_layers = wsq_ref.shape[0] // (4 * H)
    for layer in range(n_layers):
        sq = layer * 4 * H
        wq = wsq_ref[sq + 0 * H: sq + 1 * H, :]        # pre-scaled by 1/sqrt(dk)
        wk = wsq_ref[sq + 1 * H: sq + 2 * H, :]
        wv = wsq_ref[sq + 2 * H: sq + 3 * H, :]
        wo = wsq_ref[sq + 3 * H: sq + 4 * H, :]
        fb = layer * 2 * H
        w1 = wffn_ref[fb: fb + H, :]                   # (H, FFN)
        w2t = wffn_ref[fb + H: fb + 2 * H, :]          # (H, FFN) == W2^T
        b1 = b128_ref[layer: layer + 1, :]             # (1, FFN)
        r = layer * 9
        bq = b32_ref[r + 0: r + 1, :]                  # pre-scaled by 1/sqrt(dk)
        bk = b32_ref[r + 1: r + 2, :]
        bv = b32_ref[r + 2: r + 3, :]
        bo = b32_ref[r + 3: r + 4, :]
        g1 = b32_ref[r + 4: r + 5, :]
        be1 = b32_ref[r + 5: r + 6, :]
        b2 = b32_ref[r + 6: r + 7, :]
        g2 = b32_ref[r + 7: r + 8, :]
        be2 = b32_ref[r + 8: r + 9, :]

        # sublayer 1: x + Attention(LN(x))   (dropout = identity, eval mode)
        xn = layer_norm(x, g1, be1)
        q = jnp.dot(xn, wq, preferred_element_type=f32) + bq
        k = jnp.dot(xn, wk, preferred_element_type=f32) + bk
        v = jnp.dot(xn, wv, preferred_element_type=f32) + bv

        ctx = None
        for hm in head_masks:
            # zeroing the other heads' lanes of q restricts the contraction to
            # this head's DK dims; no lane slicing / transposing of q or k.
            qh = jnp.where(hm, q, 0.0)
            sc = jax.lax.dot_general(qh, k, (((1,), (1,)), ((), ())),
                                     preferred_element_type=f32) + attn_bias
            # no max-subtraction: scores are O(1) after LN, masked entries are
            # -1e9 so exp underflows to exactly 0; eps keeps 0/0 away for rows
            # whose whole sequence is padding.
            e = jnp.exp(sc)
            p = e * _fast_recip(jnp.sum(e, axis=-1, keepdims=True) + 1e-9)
            # masked v keeps this head's context in its own lane block -> summing
            # the per-head parts reproduces the head concatenation with no concat.
            part = jnp.dot(p, jnp.where(hm, v, 0.0), preferred_element_type=f32)
            ctx = part if ctx is None else ctx + part

        x = x + jnp.dot(ctx, wo, preferred_element_type=f32) + bo

        # sublayer 2: x + FFN(LN(x))         (dropout = identity, eval mode)
        xn2 = layer_norm(x, g2, be2)
        h1 = gelu(jnp.dot(xn2, w1, preferred_element_type=f32) + b1)
        x = x + jax.lax.dot_general(h1, w2t, (((1,), (1,)), ((), ())),
                                    preferred_element_type=f32) + b2

    out_ref[...] = x


# ---------------------- one-time parameter packing ---------------------------
def prepare_params(params):
    """Pack all weights into 5 VMEM-friendly slabs. Runs ONCE, outside the hot path."""
    f32 = jnp.float32
    H = HIDDEN

    # stacked, pre-widened embedding table: [tok | 0], [0 | auth], [pos | pos_a]
    emb = jnp.zeros((EMB_ROWS, HIDDEN_SUM), f32)
    emb = emb.at[:VT, :H].set(params["tok"])
    emb = emb.at[VT_PAD:VT_PAD + VA, H:].set(params["auth"])
    emb = emb.at[POS_OFF:POS_OFF + MAX_LEN, :H].set(params["pos"])
    emb = emb.at[POS_OFF:POS_OFF + MAX_LEN, H:].set(params["pos_a"])

    sq_rows, ffn_rows, b32_rows, b128_rows = [], [], [], []
    for blk in params["blocks"]:
        (wq, bq, wk, bk, wv, bv, wo, bo,
         g1, be1, w1, b1, w2, b2, g2, be2) = blk
        sq_rows += [wq * ATTN_SCALE, wk, wv, wo]       # fold 1/sqrt(dk) into Wq
        ffn_rows += [w1, w2.T]                         # W2 stored transposed
        b32_rows += [bq * ATTN_SCALE, bk, bv, bo, g1, be1, b2, g2, be2]
        b128_rows += [b1]

    packed = dict(
        emb=emb,                                        # (48, 32)
        w_sq=jnp.concatenate(sq_rows, axis=0),          # (n_layers*4*2H, 2H)
        w_ffn=jnp.concatenate(ffn_rows, axis=0),        # (n_layers*2*2H, FFN)
        b32=jnp.concatenate(b32_rows, axis=0),          # (n_layers*9, 2H)
        b128=jnp.concatenate(b128_rows, axis=0),        # (n_layers, FFN)
    )
    return jax.tree_util.tree_map(lambda a: a.astype(f32), packed)


# ----------------------------- wrapper ---------------------------------------
def _pick_tile_b(B, L):
    """Whole sequences per batch tile; one tile for small batches, lane-aligned
    (tile_rows % 128 == 0) tiles of <= MAX_TILE_ROWS rows for large batches."""
    if B * L <= MAX_TILE_ROWS:
        return B
    for tb in range(MAX_TILE_ROWS // L, 0, -1):
        if B % tb == 0 and (tb * L) % 128 == 0:
            return tb
    raise ValueError("batch cannot be split into lane-aligned tiles")


@jax.jit
def bert_forward(x_ids, xa_ids, packed):
    B, L = x_ids.shape
    BL = B * L
    tb = _pick_tile_b(B, L)
    tbl = tb * L
    grid = (B // tb,)

    # per-call data-dependent prep only (all weight prep lives in prepare_params)
    ids = x_ids.reshape(BL).astype(jnp.int32)
    aids = xa_ids.reshape(BL).astype(jnp.int32) + VT_PAD
    ar = jnp.arange(BL, dtype=jnp.int32)
    pos_ids = POS_OFF + (ar % L)
    row_tag = ar // L                                   # sequence id per row
    ints = jnp.stack([ids, aids, pos_ids, row_tag], axis=1)          # (BL, 4)
    col_tag = jnp.where(ids > 0, row_tag, -1).reshape(1, BL)         # pad keys -> -1

    def const_spec(arr):
        # weights: same block every grid step -> stay VMEM-resident across tiles
        return pl.BlockSpec(arr.shape, lambda b: (0, 0))

    out = pl.pallas_call(
        bert_fused_kernel,
        out_shape=jax.ShapeDtypeStruct((BL, HIDDEN_SUM), jnp.float32),
        grid=grid,
        in_specs=[
            pl.BlockSpec((tbl, 4), lambda b: (b, 0)),   # ints  (batch-tiled)
            pl.BlockSpec((1, tbl), lambda b: (0, b)),   # key tags (batch-tiled)
            const_spec(packed["emb"]),
            const_spec(packed["w_sq"]),
            const_spec(packed["w_ffn"]),
            const_spec(packed["b32"]),
            const_spec(packed["b128"]),
        ],
        out_specs=pl.BlockSpec((tbl, HIDDEN_SUM), lambda b: (b, 0)),
        compiler_params=pltpu.CompilerParams(
            dimension_semantics=("parallel",)),         # 2nd TC on v7x; no-op v5e/v6e
    )(ints, col_tag, packed["emb"], packed["w_sq"], packed["w_ffn"],
      packed["b32"], packed["b128"])

    return out.reshape(B, L, HIDDEN_SUM)


# ----------------------------- parameters ------------------------------------
def make_params(key):
    """Deterministic synthetic parameters (no checkpoint load)."""
    keys = iter(jax.random.split(key, 64))
    std = 0.02

    def nrm(shape):
        return (std * jax.random.normal(next(keys), shape)).astype(jnp.float32)

    # embedding tables (padding_idx=0 -> row 0 zeroed, as in nn.Embedding(padding_idx=0))
    tok = nrm((NUM_ITEMS + 2, HIDDEN)).at[0].set(0.0)
    auth = nrm((NUM_AUTHOR + 2, HIDDEN)).at[0].set(0.0)
    pos = nrm((MAX_LEN, HIDDEN))
    pos_a = nrm((MAX_LEN, HIDDEN))

    blocks = []
    for _ in range(N_LAYERS):
        blk = [
            nrm((HIDDEN_SUM, HIDDEN_SUM)), jnp.zeros((1, HIDDEN_SUM), jnp.float32),  # Wq, bq
            nrm((HIDDEN_SUM, HIDDEN_SUM)), jnp.zeros((1, HIDDEN_SUM), jnp.float32),  # Wk, bk
            nrm((HIDDEN_SUM, HIDDEN_SUM)), jnp.zeros((1, HIDDEN_SUM), jnp.float32),  # Wv, bv
            nrm((HIDDEN_SUM, HIDDEN_SUM)), jnp.zeros((1, HIDDEN_SUM), jnp.float32),  # Wo, bo
            jnp.ones((1, HIDDEN_SUM), jnp.float32), jnp.zeros((1, HIDDEN_SUM), jnp.float32),  # ln1
            nrm((HIDDEN_SUM, FFN)), jnp.zeros((1, FFN), jnp.float32),                # W1, b1
            nrm((FFN, HIDDEN_SUM)), jnp.zeros((1, HIDDEN_SUM), jnp.float32),         # W2, b2
            jnp.ones((1, HIDDEN_SUM), jnp.float32), jnp.zeros((1, HIDDEN_SUM), jnp.float32),  # ln2
        ]
        blocks.append(blk)
    return dict(tok=tok, auth=auth, pos=pos, pos_a=pos_a, blocks=blocks)


# ------------------------ pure-JAX reference (for check) ---------------------
def ref_block(x, mask, p):
    (wq, bq, wk, bk, wv, bv, wo, bo, g1, be1, w1, b1, w2, b2, g2, be2) = p
    H = x.shape[-1]

    def ln(v, g, b):
        mean = jnp.mean(v, axis=-1, keepdims=True)
        var = jnp.sum((v - mean) ** 2, axis=-1, keepdims=True) / (H - 1)
        return g[0] * (v - mean) / (jnp.sqrt(var) + LN_EPS) + b[0]

    def gelu(v):
        return 0.5 * v * (1.0 + jnp.tanh(math.sqrt(2 / math.pi) * (v + 0.044715 * v ** 3)))

    xn = ln(x, g1, be1)
    q, k, v = xn @ wq + bq[0], xn @ wk + bk[0], xn @ wv + bv[0]
    B, L, _ = x.shape
    q = q.reshape(B, L, NUM_HEADS, DK).transpose(0, 2, 1, 3)
    k = k.reshape(B, L, NUM_HEADS, DK).transpose(0, 2, 1, 3)
    v = v.reshape(B, L, NUM_HEADS, DK).transpose(0, 2, 1, 3)
    sc = jnp.einsum("bhqd,bhkd->bhqk", q, k) / math.sqrt(DK)
    sc = jnp.where(mask[:, None, :, :] == 0.0, -1e9, sc)
    pr = jax.nn.softmax(sc, axis=-1)
    ctx = jnp.einsum("bhqk,bhkd->bhqd", pr, v).transpose(0, 2, 1, 3).reshape(B, L, H)
    x = x + ctx @ wo + bo[0]
    xn2 = ln(x, g2, be2)
    x = x + gelu(xn2 @ w1 + b1[0]) @ w2 + b2[0]
    return x


def bert_forward_ref(x_ids, xa_ids, params):
    B, L = x_ids.shape
    mask = jnp.broadcast_to((x_ids > 0).astype(jnp.float32)[:, None, :], (B, L, L))
    emb = params["tok"][x_ids] + params["pos"][jnp.arange(L)][None, :, :]
    emb_a = params["auth"][xa_ids] + params["pos_a"][jnp.arange(L)][None, :, :]
    h = jnp.concatenate([emb, emb_a], axis=-1)
    for blk in params["blocks"]:
        h = ref_block(h, mask, blk)
    return h


# ---------------------------------- main -------------------------------------
if __name__ == "__main__":
    key = jax.random.PRNGKey(0)
    k_par, k_x, k_a, k_x2, k_a2 = jax.random.split(key, 5)

    params = make_params(k_par)
    packed = prepare_params(params)        # one-time packing, NOT in the per-call path

    # ---- small demo shapes (module-consistent): batch=2, seq=8, hidden_sum=32
    x_ids = jax.random.randint(k_x, (BATCH, MAX_LEN), 1, NUM_ITEMS + 2, dtype=jnp.int32)
    xa_ids = jax.random.randint(k_a, (BATCH, MAX_LEN), 1, NUM_AUTHOR + 2, dtype=jnp.int32)
    # introduce padding positions so the attention mask is actually exercised
    x_ids = x_ids.at[:, :2].set(0)
    xa_ids = xa_ids.at[:, :2].set(0)

    out = jax.block_until_ready(bert_forward(x_ids, xa_ids, packed))
    ref = jax.block_until_ready(bert_forward_ref(x_ids, xa_ids, params))
    assert out.shape == (BATCH, MAX_LEN, HIDDEN_SUM)
    assert jnp.allclose(out, ref, atol=1e-3, rtol=1e-3), "mismatch vs pure-JAX reference"

    # ---- larger batch: BL=512 folded onto sublanes, 2 batch tiles on the grid
    BIG_B = 64
    xb = jax.random.randint(k_x2, (BIG_B, MAX_LEN), 1, NUM_ITEMS + 2, dtype=jnp.int32)
    ab = jax.random.randint(k_a2, (BIG_B, MAX_LEN), 1, NUM_AUTHOR + 2, dtype=jnp.int32)
    xb = xb.at[:, :1].set(0)
    ab = ab.at[:, :1].set(0)
    out_b = jax.block_until_ready(bert_forward(xb, ab, packed))
    ref_b = jax.block_until_ready(bert_forward_ref(xb, ab, params))
    assert jnp.allclose(out_b, ref_b, atol=1e-3, rtol=1e-3), "mismatch (big batch)"

    print("KERNEL_OK")
</pallas_src>

<mosaic_0001>
module attributes {stable_mosaic.version = 11 : i64} {
  func.func @bert_fused_kernel(%arg0: i32, %arg1: memref<16x4xi32, #tpu.memory_space<vmem>>, %arg2: memref<1x16xi32, #tpu.memory_space<vmem>>, %arg3: memref<48x32xf32, #tpu.memory_space<vmem>>, %arg4: memref<256x32xf32, #tpu.memory_space<vmem>>, %arg5: memref<128x128xf32, #tpu.memory_space<vmem>>, %arg6: memref<18x32xf32, #tpu.memory_space<vmem>>, %arg7: memref<2x128xf32, #tpu.memory_space<vmem>>, %arg8: memref<16x32xf32, #tpu.memory_space<vmem>>) attributes {dimension_semantics = [#tpu.dimension_semantics<parallel>], iteration_bounds = array<i64: 1>, scalar_prefetch = 0 : i64, scratch_operands = 0 : i64, tpu.core_type = #tpu.core_type<tc>, window_params = [{transform_indices = @transform_0, window_bounds = array<i64: 16, 4>}, {transform_indices = @transform_1, window_bounds = array<i64: 1, 16>}, {pipeline_mode = #tpu.pipeline_mode<synchronous>, transform_indices = @transform_2, window_bounds = array<i64: 48, 32>}, {pipeline_mode = #tpu.pipeline_mode<synchronous>, transform_indices = @transform_3, window_bounds = array<i64: 256, 32>}, {pipeline_mode = #tpu.pipeline_mode<synchronous>, transform_indices = @transform_4, window_bounds = array<i64: 128, 128>}, {pipeline_mode = #tpu.pipeline_mode<synchronous>, transform_indices = @transform_5, window_bounds = array<i64: 18, 32>}, {pipeline_mode = #tpu.pipeline_mode<synchronous>, transform_indices = @transform_6, window_bounds = array<i64: 2, 128>}, {transform_indices = @transform_7, window_bounds = array<i64: 16, 32>}]} {
    %c0 = arith.constant 0 : index
    %c0_0 = arith.constant 0 : index
    %0 = vector.load %arg1[%c0, %c0_0] : memref<16x4xi32, #tpu.memory_space<vmem>>, vector<16x4xi32>
    %1 = vector.extract_strided_slice %0 {offsets = [0, 0], sizes = [16, 1], strides = [1, 1]} : vector<16x4xi32> to vector<16x1xi32>
    %2 = vector.extract_strided_slice %0 {offsets = [0, 1], sizes = [16, 1], strides = [1, 1]} : vector<16x4xi32> to vector<16x1xi32>
    %3 = vector.extract_strided_slice %0 {offsets = [0, 2], sizes = [16, 1], strides = [1, 1]} : vector<16x4xi32> to vector<16x1xi32>
    %4 = vector.extract_strided_slice %0 {offsets = [0, 3], sizes = [16, 1], strides = [1, 1]} : vector<16x4xi32> to vector<16x1xi32>
    %5 = tpu.iota {dimensions = array<i32: 1>} : vector<16x48xi32>
    %6 = vector.broadcast %1 : vector<16x1xi32> to vector<16x48xi32>
    %7 = arith.cmpi eq, %5, %6 : vector<16x48xi32>
    %8 = vector.broadcast %2 : vector<16x1xi32> to vector<16x48xi32>
    %9 = arith.cmpi eq, %5, %8 : vector<16x48xi32>
    %10 = arith.ori %7, %9 : vector<16x48xi1>
    %11 = vector.broadcast %3 : vector<16x1xi32> to vector<16x48xi32>
    %12 = arith.cmpi eq, %5, %11 : vector<16x48xi32>
    %13 = arith.ori %10, %12 : vector<16x48xi1>
    %14 = arith.extui %13 : vector<16x48xi1> to vector<16x48xi32>
    %15 = arith.sitofp %14 : vector<16x48xi32> to vector<16x48xf32>
    %c0_1 = arith.constant 0 : index
    %c0_2 = arith.constant 0 : index
    %16 = vector.load %arg3[%c0_1, %c0_2] : memref<48x32xf32, #tpu.memory_space<vmem>>, vector<48x32xf32>
    %cst = arith.constant dense<0.000000e+00> : vector<16x32xf32>
    %17 = tpu.matmul %15, %16, %cst {dimension_numbers = #tpu.dot_dimension_numbers<[1], [0], [0], [1], [0, 0, 1, 1], [], []>} : vector<16x48xf32>, vector<48x32xf32>, vector<16x32xf32> -> vector<16x32xf32>
    %c0_3 = arith.constant 0 : index
    %c0_4 = arith.constant 0 : index
    %18 = vector.load %arg2[%c0_3, %c0_4] : memref<1x16xi32, #tpu.memory_space<vmem>>, vector<1x16xi32>
    %19 = vector.broadcast %4 : vector<16x1xi32> to vector<16x16xi32>
    %20 = vector.broadcast %18 : vector<1x16xi32> to vector<16x16xi32>
    %21 = arith.cmpi eq, %19, %20 : vector<16x16xi32>
    %cst_5 = arith.constant 0.000000e+00 : f32
    %cst_6 = arith.constant -1.000000e+09 : f32
    %22 = vector.broadcast %cst_5 : f32 to vector<16x16xf32>
    %23 = vector.broadcast %cst_6 : f32 to vector<16x16xf32>
    %24 = arith.select %21, %22, %23 : vector<16x16xi1>, vector<16x16xf32>
    %25 = tpu.iota {dimensions = array<i32: 1>} : vector<1x32xi32>
    %c0_i32 = arith.constant 0 : i32
    %26 = vector.broadcast %c0_i32 : i32 to vector<1x32xi32>
    %27 = arith.cmpi sge, %25, %26 : vector<1x32xi32>
    %c16_i32 = arith.constant 16 : i32
    %28 = vector.broadcast %c16_i32 : i32 to vector<1x32xi32>
    %29 = arith.cmpi slt, %25, %28 : vector<1x32xi32>
    %30 = arith.andi %27, %29 : vector<1x32xi1>
    %c16_i32_7 = arith.constant 16 : i32
    %31 = vector.broadcast %c16_i32_7 : i32 to vector<1x32xi32>
    %32 = arith.cmpi sge, %25, %31 : vector<1x32xi32>
    %c32_i32 = arith.constant 32 : i32
    %33 = vector.broadcast %c32_i32 : i32 to vector<1x32xi32>
    %34 = arith.cmpi slt, %25, %33 : vector<1x32xi32>
    %35 = arith.andi %32, %34 : vector<1x32xi1>
    %c0_8 = arith.constant 0 : index
    %c0_9 = arith.constant 0 : index
    %36 = vector.load %arg4[%c0_8, %c0_9] : memref<256x32xf32, #tpu.memory_space<vmem>>, vector<32x32xf32>
    %c32 = arith.constant 32 : index
    %c0_10 = arith.constant 0 : index
    %37 = vector.load %arg4[%c32, %c0_10] : memref<256x32xf32, #tpu.memory_space<vmem>>, vector<32x32xf32>
    %c64 = arith.constant 64 : index
    %c0_11 = arith.constant 0 : index
    %38 = vector.load %arg4[%c64, %c0_11] : memref<256x32xf32, #tpu.memory_space<vmem>>, vector<32x32xf32>
    %c96 = arith.constant 96 : index
    %c0_12 = arith.constant 0 : index
    %39 = vector.load %arg4[%c96, %c0_12] : memref<256x32xf32, #tpu.memory_space<vmem>>, vector<32x32xf32>
    %c0_13 = arith.constant 0 : index
    %c0_14 = arith.constant 0 : index
    %40 = vector.load %arg5[%c0_13, %c0_14] : memref<128x128xf32, #tpu.memory_space<vmem>>, vector<32x128xf32>
    %c32_15 = arith.constant 32 : index
    %c0_16 = arith.constant 0 : index
    %41 = vector.load %arg5[%c32_15, %c0_16] : memref<128x128xf32, #tpu.memory_space<vmem>>, vector<32x128xf32>
    %c0_17 = arith.constant 0 : index
    %c0_18 = arith.constant 0 : index
    %42 = vector.load %arg7[%c0_17, %c0_18] : memref<2x128xf32, #tpu.memory_space<vmem>>, vector<1x128xf32>
    %c0_19 = arith.constant 0 : index
    %c0_20 = arith.constant 0 : index
    %43 = vector.load %arg6[%c0_19, %c0_20] : memref<18x32xf32, #tpu.memory_space<vmem>>, vector<1x32xf32>
    %c1 = arith.constant 1 : index
    %c0_21 = arith.constant 0 : index
    %44 = vector.load %arg6[%c1, %c0_21] : memref<18x32xf32, #tpu.memory_space<vmem>>, vector<1x32xf32>
    %c2 = arith.constant 2 : index
    %c0_22 = arith.constant 0 : index
    %45 = vector.load %arg6[%c2, %c0_22] : memref<18x32xf32, #tpu.memory_space<vmem>>, vector<1x32xf32>
    %c3 = arith.constant 3 : index
    %c0_23 = arith.constant 0 : index
    %46 = vector.load %arg6[%c3, %c0_23] : memref<18x32xf32, #tpu.memory_space<vmem>>, vector<1x32xf32>
    %c4 = arith.constant 4 : index
    %c0_24 = arith.constant 0 : index
    %47 = vector.load %arg6[%c4, %c0_24] : memref<18x32xf32, #tpu.memory_space<vmem>>, vector<1x32xf32>
    %c5 = arith.constant 5 : index
    %c0_25 = arith.constant 0 : index
    %48 = vector.load %arg6[%c5, %c0_25] : memref<18x32xf32, #tpu.memory_space<vmem>>, vector<1x32xf32>
    %c6 = arith.constant 6 : index
    %c0_26 = arith.constant 0 : index
    %49 = vector.load %arg6[%c6, %c0_26] : memref<18x32xf32, #tpu.memory_space<vmem>>, vector<1x32xf32>
    %c7 = arith.constant 7 : index
    %c0_27 = arith.constant 0 : index
    %50 = vector.load %arg6[%c7, %c0_27] : memref<18x32xf32, #tpu.memory_space<vmem>>, vector<1x32xf32>
    %c8 = arith.constant 8 : index
    %c0_28 = arith.constant 0 : index
    %51 = vector.load %arg6[%c8, %c0_28] : memref<18x32xf32, #tpu.memory_space<vmem>>, vector<1x32xf32>
    %cst_29 = arith.constant dense<0.000000e+00> : vector<16xf32>
    %52 = vector.multi_reduction <add>, %17, %cst_29 [1] : vector<16x32xf32> to vector<16xf32>
    %53 = vector.shape_cast %52 : vector<16xf32> to vector<16x1xf32>
    %cst_30 = arith.constant 3.200000e+01 : f32
    %54 = vector.broadcast %cst_30 : f32 to vector<16x1xf32>
    %55 = arith.divf %53, %54 : vector<16x1xf32>
    %56 = vector.broadcast %55 : vector<16x1xf32> to vector<16x32xf32>
    %57 = arith.subf %17, %56 : vector<16x32xf32>
    %58 = arith.mulf %57, %57 : vector<16x32xf32>
    %cst_31 = arith.constant dense<0.000000e+00> : vector<16xf32>
    %59 = vector.multi_reduction <add>, %58, %cst_31 [1] : vector<16x32xf32> to vector<16xf32>
    %60 = vector.shape_cast %59 : vector<16xf32> to vector<16x1xf32>
    %cst_32 = arith.constant 0.0322580636 : f32
    %61 = vector.broadcast %cst_32 : f32 to vector<16x1xf32>
    %62 = arith.mulf %60, %61 : vector<16x1xf32>
    %63 = vector.broadcast %47 : vector<1x32xf32> to vector<16x32xf32>
    %64 = arith.mulf %63, %57 : vector<16x32xf32>
    %65 = math.sqrt %62 : vector<16x1xf32>
    %cst_33 = arith.constant 9.99999997E-7 : f32
    %66 = vector.broadcast %cst_33 : f32 to vector<16x1xf32>
    %67 = arith.addf %65, %66 : vector<16x1xf32>
    %68 = tpu.reciprocal %67 {approx = true} : vector<16x1xf32> -> vector<16x1xf32>
    %69 = arith.mulf %67, %68 : vector<16x1xf32>
    %cst_34 = arith.constant 2.000000e+00 : f32
    %70 = vector.broadcast %cst_34 : f32 to vector<16x1xf32>
    %71 = arith.subf %70, %69 : vector<16x1xf32>
    %72 = arith.mulf %68, %71 : vector<16x1xf32>
    %73 = vector.broadcast %72 : vector<16x1xf32> to vector<16x32xf32>
    %74 = arith.mulf %64, %73 : vector<16x32xf32>
    %75 = vector.broadcast %48 : vector<1x32xf32> to vector<16x32xf32>
    %76 = arith.addf %74, %75 : vector<16x32xf32>
    %cst_35 = arith.constant dense<0.000000e+00> : vector<16x32xf32>
    %77 = tpu.matmul %76, %36, %cst_35 {dimension_numbers = #tpu.dot_dimension_numbers<[1], [0], [0], [1], [0, 0, 1, 1], [], []>} : vector<16x32xf32>, vector<32x32xf32>, vector<16x32xf32> -> vector<16x32xf32>
    %78 = vector.broadcast %43 : vector<1x32xf32> to vector<16x32xf32>
    %79 = arith.addf %77, %78 : vector<16x32xf32>
    %cst_36 = arith.constant dense<0.000000e+00> : vector<16x32xf32>
    %80 = tpu.matmul %76, %37, %cst_36 {dimension_numbers = #tpu.dot_dimension_numbers<[1], [0], [0], [1], [0, 0, 1, 1], [], []>} : vector<16x32xf32>, vector<32x32xf32>, vector<16x32xf32> -> vector<16x32xf32>
    %81 = vector.broadcast %44 : vector<1x32xf32> to vector<16x32xf32>
    %82 = arith.addf %80, %81 : vector<16x32xf32>
    %cst_37 = arith.constant dense<0.000000e+00> : vector<16x32xf32>
    %83 = tpu.matmul %76, %38, %cst_37 {dimension_numbers = #tpu.dot_dimension_numbers<[1], [0], [0], [1], [0, 0, 1, 1], [], []>} : vector<16x32xf32>, vector<32x32xf32>, vector<16x32xf32> -> vector<16x32xf32>
    %84 = vector.broadcast %45 : vector<1x32xf32> to vector<16x32xf32>
    %85 = arith.addf %83, %84 : vector<16x32xf32>
    %cst_38 = arith.constant 0.000000e+00 : f32
    %86 = vector.shape_cast %30 : vector<1x32xi1> to vector<1x32xi1>
    %87 = vector.broadcast %86 : vector<1x32xi1> to vector<16x32xi1>
    %88 = vector.broadcast %cst_38 : f32 to vector<16x32xf32>
    %89 = arith.select %87, %79, %88 : vector<16x32xi1>, vector<16x32xf32>
    %cst_39 = arith.constant dense<0.000000e+00> : vector<16x16xf32>
    %90 = tpu.matmul %89, %82, %cst_39 {dimension_numbers = #tpu.dot_dimension_numbers<[1], [1], [0], [0], [0, 0, 1, 0], [], []>} : vector<16x32xf32>, vector<16x32xf32>, vector<16x16xf32> -> vector<16x16xf32>
    %91 = arith.addf %90, %24 : vector<16x16xf32>
    %92 = math.exp %91 : vector<16x16xf32>
    %cst_40 = arith.constant dense<0.000000e+00> : vector<16xf32>
    %93 = vector.multi_reduction <add>, %92, %cst_40 [1] : vector<16x16xf32> to vector<16xf32>
    %94 = vector.shape_cast %93 : vector<16xf32> to vector<16x1xf32>
    %cst_41 = arith.constant 9.99999971E-10 : f32
    %95 = vector.broadcast %cst_41 : f32 to vector<16x1xf32>
    %96 = arith.addf %94, %95 : vector<16x1xf32>
    %97 = tpu.reciprocal %96 {approx = true} : vector<16x1xf32> -> vector<16x1xf32>
    %98 = arith.mulf %96, %97 : vector<16x1xf32>
    %cst_42 = arith.constant 2.000000e+00 : f32
    %99 = vector.broadcast %cst_42 : f32 to vector<16x1xf32>
    %100 = arith.subf %99, %98 : vector<16x1xf32>
    %101 = arith.mulf %97, %100 : vector<16x1xf32>
    %102 = vector.broadcast %101 : vector<16x1xf32> to vector<16x16xf32>
    %103 = arith.mulf %92, %102 : vector<16x16xf32>
    %cst_43 = arith.constant 0.000000e+00 : f32
    %104 = vector.shape_cast %30 : vector<1x32xi1> to vector<1x32xi1>
    %105 = vector.broadcast %104 : vector<1x32xi1> to vector<16x32xi1>
    %106 = vector.broadcast %cst_43 : f32 to vector<16x32xf32>
    %107 = arith.select %105, %85, %106 : vector<16x32xi1>, vector<16x32xf32>
    %cst_44 = arith.constant dense<0.000000e+00> : vector<16x32xf32>
    %108 = tpu.matmul %103, %107, %cst_44 {dimension_numbers = #tpu.dot_dimension_numbers<[1], [0], [0], [1], [0, 0, 1, 1], [], []>} : vector<16x16xf32>, vector<16x32xf32>, vector<16x32xf32> -> vector<16x32xf32>
    %cst_45 = arith.constant 0.000000e+00 : f32
    %109 = vector.shape_cast %35 : vector<1x32xi1> to vector<1x32xi1>
    %110 = vector.broadcast %109 : vector<1x32xi1> to vector<16x32xi1>
    %111 = vector.broadcast %cst_45 : f32 to vector<16x32xf32>
    %112 = arith.select %110, %79, %111 : vector<16x32xi1>, vector<16x32xf32>
    %cst_46 = arith.constant dense<0.000000e+00> : vector<16x16xf32>
    %113 = tpu.matmul %112, %82, %cst_46 {dimension_numbers = #tpu.dot_dimension_numbers<[1], [1], [0], [0], [0, 0, 1, 0], [], []>} : vector<16x32xf32>, vector<16x32xf32>, vector<16x16xf32> -> vector<16x16xf32>
    %114 = arith.addf %113, %24 : vector<16x16xf32>
    %115 = math.exp %114 : vector<16x16xf32>
    %cst_47 = arith.constant dense<0.000000e+00> : vector<16xf32>
    %116 = vector.multi_reduction <add>, %115, %cst_47 [1] : vector<16x16xf32> to vector<16xf32>
    %117 = vector.shape_cast %116 : vector<16xf32> to vector<16x1xf32>
    %cst_48 = arith.constant 9.99999971E-10 : f32
    %118 = vector.broadcast %cst_48 : f32 to vector<16x1xf32>
    %119 = arith.addf %117, %118 : vector<16x1xf32>
    %120 = tpu.reciprocal %119 {approx = true} : vector<16x1xf32> -> vector<16x1xf32>
    %121 = arith.mulf %119, %120 : vector<16x1xf32>
    %cst_49 = arith.constant 2.000000e+00 : f32
    %122 = vector.broadcast %cst_49 : f32 to vector<16x1xf32>
    %123 = arith.subf %122, %121 : vector<16x1xf32>
    %124 = arith.mulf %120, %123 : vector<16x1xf32>
    %125 = vector.broadcast %124 : vector<16x1xf32> to vector<16x16xf32>
    %126 = arith.mulf %115, %125 : vector<16x16xf32>
    %cst_50 = arith.constant 0.000000e+00 : f32
    %127 = vector.shape_cast %35 : vector<1x32xi1> to vector<1x32xi1>
    %128 = vector.broadcast %127 : vector<1x32xi1> to vector<16x32xi1>
    %129 = vector.broadcast %cst_50 : f32 to vector<16x32xf32>
    %130 = arith.select %128, %85, %129 : vector<16x32xi1>, vector<16x32xf32>
    %cst_51 = arith.constant dense<0.000000e+00> : vector<16x32xf32>
    %131 = tpu.matmul %126, %130, %cst_51 {dimension_numbers = #tpu.dot_dimension_numbers<[1], [0], [0], [1], [0, 0, 1, 1], [], []>} : vector<16x16xf32>, vector<16x32xf32>, vector<16x32xf32> -> vector<16x32xf32>
    %132 = arith.addf %108, %131 : vector<16x32xf32>
    %cst_52 = arith.constant dense<0.000000e+00> : vector<16x32xf32>
    %133 = tpu.matmul %132, %39, %cst_52 {dimension_numbers = #tpu.dot_dimension_numbers<[1], [0], [0], [1], [0, 0, 1, 1], [], []>} : vector<16x32xf32>, vector<32x32xf32>, vector<16x32xf32> -> vector<16x32xf32>
    %134 = arith.addf %17, %133 : vector<16x32xf32>
    %135 = vector.broadcast %46 : vector<1x32xf32> to vector<16x32xf32>
    %136 = arith.addf %134, %135 : vector<16x32xf32>
    %cst_53 = arith.constant dense<0.000000e+00> : vector<16xf32>
    %137 = vector.multi_reduction <add>, %136, %cst_53 [1] : vector<16x32xf32> to vector<16xf32>
    %138 = vector.shape_cast %137 : vector<16xf32> to vector<16x1xf32>
    %cst_54 = arith.constant 3.200000e+01 : f32
    %139 = vector.broadcast %cst_54 : f32 to vector<16x1xf32>
    %140 = arith.divf %138, %139 : vector<16x1xf32>
    %141 = vector.broadcast %140 : vector<16x1xf32> to vector<16x32xf32>
    %142 = arith.subf %136, %141 : vector<16x32xf32>
    %143 = arith.mulf %142, %142 : vector<16x32xf32>
    %cst_55 = arith.constant dense<0.000000e+00> : vector<16xf32>
    %144 = vector.multi_reduction <add>, %143, %cst_55 [1] : vector<16x32xf32> to vector<16xf32>
    %145 = vector.shape_cast %144 : vector<16xf32> to vector<16x1xf32>
    %cst_56 = arith.constant 0.0322580636 : f32
    %146 = vector.broadcast %cst_56 : f32 to vector<16x1xf32>
    %147 = arith.mulf %145, %146 : vector<16x1xf32>
    %148 = vector.broadcast %50 : vector<1x32xf32> to vector<16x32xf32>
    %149 = arith.mulf %148, %142 : vector<16x32xf32>
    %150 = math.sqrt %147 : vector<16x1xf32>
    %cst_57 = arith.constant 9.99999997E-7 : f32
    %151 = vector.broadcast %cst_57 : f32 to vector<16x1xf32>
    %152 = arith.addf %150, %151 : vector<16x1xf32>
    %153 = tpu.reciprocal %152 {approx = true} : vector<16x1xf32> -> vector<16x1xf32>
    %154 = arith.mulf %152, %153 : vector<16x1xf32>
    %cst_58 = arith.constant 2.000000e+00 : f32
    %155 = vector.broadcast %cst_58 : f32 to vector<16x1xf32>
    %156 = arith.subf %155, %154 : vector<16x1xf32>
    %157 = arith.mulf %153, %156 : vector<16x1xf32>
    %158 = vector.broadcast %157 : vector<16x1xf32> to vector<16x32xf32>
    %159 = arith.mulf %149, %158 : vector<16x32xf32>
    %160 = vector.broadcast %51 : vector<1x32xf32> to vector<16x32xf32>
    %161 = arith.addf %159, %160 : vector<16x32xf32>
    %cst_59 = arith.constant dense<0.000000e+00> : vector<16x128xf32>
    %162 = tpu.matmul %161, %40, %cst_59 {dimension_numbers = #tpu.dot_dimension_numbers<[1], [0], [0], [1], [0, 0, 1, 1], [], []>} : vector<16x32xf32>, vector<32x128xf32>, vector<16x128xf32> -> vector<16x128xf32>
    %163 = vector.broadcast %42 : vector<1x128xf32> to vector<16x128xf32>
    %164 = arith.addf %162, %163 : vector<16x128xf32>
    %cst_60 = arith.constant 5.000000e-01 : f32
    %165 = vector.broadcast %cst_60 : f32 to vector<16x128xf32>
    %166 = arith.mulf %165, %164 : vector<16x128xf32>
    %cst_61 = arith.constant 4.471500e-02 : f32
    %167 = vector.broadcast %cst_61 : f32 to vector<16x128xf32>
    %168 = arith.mulf %167, %164 : vector<16x128xf32>
    %169 = arith.mulf %168, %164 : vector<16x128xf32>
    %170 = arith.mulf %169, %164 : vector<16x128xf32>
    %171 = arith.addf %164, %170 : vector<16x128xf32>
    %cst_62 = arith.constant 0.797884583 : f32
    %172 = vector.broadcast %cst_62 : f32 to vector<16x128xf32>
    %173 = arith.mulf %172, %171 : vector<16x128xf32>
    %174 = math.tanh %173 : vector<16x128xf32>
    %cst_63 = arith.constant 1.000000e+00 : f32
    %175 = vector.broadcast %cst_63 : f32 to vector<16x128xf32>
    %176 = arith.addf %175, %174 : vector<16x128xf32>
    %177 = arith.mulf %166, %176 : vector<16x128xf32>
    %cst_64 = arith.constant dense<0.000000e+00> : vector<16x32xf32>
    %178 = tpu.matmul %177, %41, %cst_64 {dimension_numbers = #tpu.dot_dimension_numbers<[1], [1], [0], [0], [0, 0, 1, 0], [], []>} : vector<16x128xf32>, vector<32x128xf32>, vector<16x32xf32> -> vector<16x32xf32>
    %179 = arith.addf %136, %178 : vector<16x32xf32>
    %180 = vector.broadcast %49 : vector<1x32xf32> to vector<16x32xf32>
    %181 = arith.addf %179, %180 : vector<16x32xf32>
    %c128 = arith.constant 128 : index
    %c0_65 = arith.constant 0 : index
    %182 = vector.load %arg4[%c128, %c0_65] : memref<256x32xf32, #tpu.memory_space<vmem>>, vector<32x32xf32>
    %c160 = arith.constant 160 : index
    %c0_66 = arith.constant 0 : index
    %183 = vector.load %arg4[%c160, %c0_66] : memref<256x32xf32, #tpu.memory_space<vmem>>, vector<32x32xf32>
    %c192 = arith.constant 192 : index
    %c0_67 = arith.constant 0 : index
    %184 = vector.load %arg4[%c192, %c0_67] : memref<256x32xf32, #tpu.memory_space<vmem>>, vector<32x32xf32>
    %c224 = arith.constant 224 : index
    %c0_68 = arith.constant 0 : index
    %185 = vector.load %arg4[%c224, %c0_68] : memref<256x32xf32, #tpu.memory_space<vmem>>, vector<32x32xf32>
    %c64_69 = arith.constant 64 : index
    %c0_70 = arith.constant 0 : index
    %186 = vector.load %arg5[%c64_69, %c0_70] : memref<128x128xf32, #tpu.memory_space<vmem>>, vector<32x128xf32>
    %c96_71 = arith.constant 96 : index
    %c0_72 = arith.constant 0 : index
    %187 = vector.load %arg5[%c96_71, %c0_72] : memref<128x128xf32, #tpu.memory_space<vmem>>, vector<32x128xf32>
    %c1_73 = arith.constant 1 : index
    %c0_74 = arith.constant 0 : index
    %188 = vector.load %arg7[%c1_73, %c0_74] : memref<2x128xf32, #tpu.memory_space<vmem>>, vector<1x128xf32>
    %c9 = arith.constant 9 : index
    %c0_75 = arith.constant 0 : index
    %189 = vector.load %arg6[%c9, %c0_75] : memref<18x32xf32, #tpu.memory_space<vmem>>, vector<1x32xf32>
    %c10 = arith.constant 10 : index
    %c0_76 = arith.constant 0 : index
    %190 = vector.load %arg6[%c10, %c0_76] : memref<18x32xf32, #tpu.memory_space<vmem>>, vector<1x32xf32>
    %c11 = arith.constant 11 : index
    %c0_77 = arith.constant 0 : index
    %191 = vector.load %arg6[%c11, %c0_77] : memref<18x32xf32, #tpu.memory_space<vmem>>, vector<1x32xf32>
    %c12 = arith.constant 12 : index
    %c0_78 = arith.constant 0 : index
    %192 = vector.load %arg6[%c12, %c0_78] : memref<18x32xf32, #tpu.memory_space<vmem>>, vector<1x32xf32>
    %c13 = arith.constant 13 : index
    %c0_79 = arith.constant 0 : index
    %193 = vector.load %arg6[%c13, %c0_79] : memref<18x32xf32, #tpu.memory_space<vmem>>, vector<1x32xf32>
    %c14 = arith.constant 14 : index
    %c0_80 = arith.constant 0 : index
    %194 = vector.load %arg6[%c14, %c0_80] : memref<18x32xf32, #tpu.memory_space<vmem>>, vector<1x32xf32>
    %c15 = arith.constant 15 : index
    %c0_81 = arith.constant 0 : index
    %195 = vector.load %arg6[%c15, %c0_81] : memref<18x32xf32, #tpu.memory_space<vmem>>, vector<1x32xf32>
    %c16 = arith.constant 16 : index
    %c0_82 = arith.constant 0 : index
    %196 = vector.load %arg6[%c16, %c0_82] : memref<18x32xf32, #tpu.memory_space<vmem>>, vector<1x32xf32>
    %c17 = arith.constant 17 : index
    %c0_83 = arith.constant 0 : index
    %197 = vector.load %arg6[%c17, %c0_83] : memref<18x32xf32, #tpu.memory_space<vmem>>, vector<1x32xf32>
    %cst_84 = arith.constant dense<0.000000e+00> : vector<16xf32>
    %198 = vector.multi_reduction <add>, %181, %cst_84 [1] : vector<16x32xf32> to vector<16xf32>
    %199 = vector.shape_cast %198 : vector<16xf32> to vector<16x1xf32>
    %cst_85 = arith.constant 3.200000e+01 : f32
    %200 = vector.broadcast %cst_85 : f32 to vector<16x1xf32>
    %201 = arith.divf %199, %200 : vector<16x1xf32>
    %202 = vector.broadcast %201 : vector<16x1xf32> to vector<16x32xf32>
    %203 = arith.subf %181, %202 : vector<16x32xf32>
    %204 = arith.mulf %203, %203 : vector<16x32xf32>
    %cst_86 = arith.constant dense<0.000000e+00> : vector<16xf32>
    %205 = vector.multi_reduction <add>, %204, %cst_86 [1] : vector<16x32xf32> to vector<16xf32>
    %206 = vector.shape_cast %205 : vector<16xf32> to vector<16x1xf32>
    %cst_87 = arith.constant 0.0322580636 : f32
    %207 = vector.broadcast %cst_87 : f32 to vector<16x1xf32>
    %208 = arith.mulf %206, %207 : vector<16x1xf32>
    %209 = vector.broadcast %193 : vector<1x32xf32> to vector<16x32xf32>
    %210 = arith.mulf %209, %203 : vector<16x32xf32>
    %211 = math.sqrt %208 : vector<16x1xf32>
    %cst_88 = arith.constant 9.99999997E-7 : f32
    %212 = vector.broadcast %cst_88 : f32 to vector<16x1xf32>
    %213 = arith.addf %211, %212 : vector<16x1xf32>
    %214 = tpu.reciprocal %213 {approx = true} : vector<16x1xf32> -> vector<16x1xf32>
    %215 = arith.mulf %213, %214 : vector<16x1xf32>
    %cst_89 = arith.constant 2.000000e+00 : f32
    %216 = vector.broadcast %cst_89 : f32 to vector<16x1xf32>
    %217 = arith.subf %216, %215 : vector<16x1xf32>
    %218 = arith.mulf %214, %217 : vector<16x1xf32>
    %219 = vector.broadcast %218 : vector<16x1xf32> to vector<16x32xf32>
    %220 = arith.mulf %210, %219 : vector<16x32xf32>
    %221 = vector.broadcast %194 : vector<1x32xf32> to vector<16x32xf32>
    %222 = arith.addf %220, %221 : vector<16x32xf32>
    %cst_90 = arith.constant dense<0.000000e+00> : vector<16x32xf32>
    %223 = tpu.matmul %222, %182, %cst_90 {dimension_numbers = #tpu.dot_dimension_numbers<[1], [0], [0], [1], [0, 0, 1, 1], [], []>} : vector<16x32xf32>, vector<32x32xf32>, vector<16x32xf32> -> vector<16x32xf32>
    %224 = vector.broadcast %189 : vector<1x32xf32> to vector<16x32xf32>
    %225 = arith.addf %223, %224 : vector<16x32xf32>
    %cst_91 = arith.constant dense<0.000000e+00> : vector<16x32xf32>
    %226 = tpu.matmul %222, %183, %cst_91 {dimension_numbers = #tpu.dot_dimension_numbers<[1], [0], [0], [1], [0, 0, 1, 1], [], []>} : vector<16x32xf32>, vector<32x32xf32>, vector<16x32xf32> -> vector<16x32xf32>
    %227 = vector.broadcast %190 : vector<1x32xf32> to vector<16x32xf32>
    %228 = arith.addf %226, %227 : vector<16x32xf32>
    %cst_92 = arith.constant dense<0.000000e+00> : vector<16x32xf32>
    %229 = tpu.matmul %222, %184, %cst_92 {dimension_numbers = #tpu.dot_dimension_numbers<[1], [0], [0], [1], [0, 0, 1, 1], [], []>} : vector<16x32xf32>, vector<32x32xf32>, vector<16x32xf32> -> vector<16x32xf32>
    %230 = vector.broadcast %191 : vector<1x32xf32> to vector<16x32xf32>
    %231 = arith.addf %229, %230 : vector<16x32xf32>
    %cst_93 = arith.constant 0.000000e+00 : f32
    %232 = vector.shape_cast %30 : vector<1x32xi1> to vector<1x32xi1>
    %233 = vector.broadcast %232 : vector<1x32xi1> to vector<16x32xi1>
    %234 = vector.broadcast %cst_93 : f32 to vector<16x32xf32>
    %235 = arith.select %233, %225, %234 : vector<16x32xi1>, vector<16x32xf32>
    %cst_94 = arith.constant dense<0.000000e+00> : vector<16x16xf32>
    %236 = tpu.matmul %235, %228, %cst_94 {dimension_numbers = #tpu.dot_dimension_numbers<[1], [1], [0], [0], [0, 0, 1, 0], [], []>} : vector<16x32xf32>, vector<16x32xf32>, vector<16x16xf32> -> vector<16x16xf32>
    %237 = arith.addf %236, %24 : vector<16x16xf32>
    %238 = math.exp %237 : vector<16x16xf32>
    %cst_95 = arith.constant dense<0.000000e+00> : vector<16xf32>
    %239 = vector.multi_reduction <add>, %238, %cst_95 [1] : vector<16x16xf32> to vector<16xf32>
    %240 = vector.shape_cast %239 : vector<16xf32> to vector<16x1xf32>
    %cst_96 = arith.constant 9.99999971E-10 : f32
    %241 = vector.broadcast %cst_96 : f32 to vector<16x1xf32>
    %242 = arith.addf %240, %241 : vector<16x1xf32>
    %243 = tpu.reciprocal %242 {approx = true} : vector<16x1xf32> -> vector<16x1xf32>
    %244 = arith.mulf %242, %243 : vector<16x1xf32>
    %cst_97 = arith.constant 2.000000e+00 : f32
    %245 = vector.broadcast %cst_97 : f32 to vector<16x1xf32>
    %246 = arith.subf %245, %244 : vector<16x1xf32>
    %247 = arith.mulf %243, %246 : vector<16x1xf32>
    %248 = vector.broadcast %247 : vector<16x1xf32> to vector<16x16xf32>
    %249 = arith.mulf %238, %248 : vector<16x16xf32>
    %cst_98 = arith.constant 0.000000e+00 : f32
    %250 = vector.shape_cast %30 : vector<1x32xi1> to vector<1x32xi1>
    %251 = vector.broadcast %250 : vector<1x32xi1> to vector<16x32xi1>
    %252 = vector.broadcast %cst_98 : f32 to vector<16x32xf32>
    %253 = arith.select %251, %231, %252 : vector<16x32xi1>, vector<16x32xf32>
    %cst_99 = arith.constant dense<0.000000e+00> : vector<16x32xf32>
    %254 = tpu.matmul %249, %253, %cst_99 {dimension_numbers = #tpu.dot_dimension_numbers<[1], [0], [0], [1], [0, 0, 1, 1], [], []>} : vector<16x16xf32>, vector<16x32xf32>, vector<16x32xf32> -> vector<16x32xf32>
    %cst_100 = arith.constant 0.000000e+00 : f32
    %255 = vector.shape_cast %35 : vector<1x32xi1> to vector<1x32xi1>
    %256 = vector.broadcast %255 : vector<1x32xi1> to vector<16x32xi1>
    %257 = vector.broadcast %cst_100 : f32 to vector<16x32xf32>
    %258 = arith.select %256, %225, %257 : vector<16x32xi1>, vector<16x32xf32>
    %cst_101 = arith.constant dense<0.000000e+00> : vector<16x16xf32>
    %259 = tpu.matmul %258, %228, %cst_101 {dimension_numbers = #tpu.dot_dimension_numbers<[1], [1], [0], [0], [0, 0, 1, 0], [], []>} : vector<16x32xf32>, vector<16x32xf32>, vector<16x16xf32> -> vector<16x16xf32>
    %260 = arith.addf %259, %24 : vector<16x16xf32>
    %261 = math.exp %260 : vector<16x16xf32>
    %cst_102 = arith.constant dense<0.000000e+00> : vector<16xf32>
    %262 = vector.multi_reduction <add>, %261, %cst_102 [1] : vector<16x16xf32> to vector<16xf32>
    %263 = vector.shape_cast %262 : vector<16xf32> to vector<16x1xf32>
    %cst_103 = arith.constant 9.99999971E-10 : f32
    %264 = vector.broadcast %cst_103 : f32 to vector<16x1xf32>
    %265 = arith.addf %263, %264 : vector<16x1xf32>
    %266 = tpu.reciprocal %265 {approx = true} : vector<16x1xf32> -> vector<16x1xf32>
    %267 = arith.mulf %265, %266 : vector<16x1xf32>
    %cst_104 = arith.constant 2.000000e+00 : f32
    %268 = vector.broadcast %cst_104 : f32 to vector<16x1xf32>
    %269 = arith.subf %268, %267 : vector<16x1xf32>
    %270 = arith.mulf %266, %269 : vector<16x1xf32>
    %271 = vector.broadcast %270 : vector<16x1xf32> to vector<16x16xf32>
    %272 = arith.mulf %261, %271 : vector<16x16xf32>
    %cst_105 = arith.constant 0.000000e+00 : f32
    %273 = vector.shape_cast %35 : vector<1x32xi1> to vector<1x32xi1>
    %274 = vector.broadcast %273 : vector<1x32xi1> to vector<16x32xi1>
    %275 = vector.broadcast %cst_105 : f32 to vector<16x32xf32>
    %276 = arith.select %274, %231, %275 : vector<16x32xi1>, vector<16x32xf32>
    %cst_106 = arith.constant dense<0.000000e+00> : vector<16x32xf32>
    %277 = tpu.matmul %272, %276, %cst_106 {dimension_numbers = #tpu.dot_dimension_numbers<[1], [0], [0], [1], [0, 0, 1, 1], [], []>} : vector<16x16xf32>, vector<16x32xf32>, vector<16x32xf32> -> vector<16x32xf32>
    %278 = arith.addf %254, %277 : vector<16x32xf32>
    %cst_107 = arith.constant dense<0.000000e+00> : vector<16x32xf32>
    %279 = tpu.matmul %278, %185, %cst_107 {dimension_numbers = #tpu.dot_dimension_numbers<[1], [0], [0], [1], [0, 0, 1, 1], [], []>} : vector<16x32xf32>, vector<32x32xf32>, vector<16x32xf32> -> vector<16x32xf32>
    %280 = arith.addf %181, %279 : vector<16x32xf32>
    %281 = vector.broadcast %192 : vector<1x32xf32> to vector<16x32xf32>
    %282 = arith.addf %280, %281 : vector<16x32xf32>
    %cst_108 = arith.constant dense<0.000000e+00> : vector<16xf32>
    %283 = vector.multi_reduction <add>, %282, %cst_108 [1] : vector<16x32xf32> to vector<16xf32>
    %284 = vector.shape_cast %283 : vector<16xf32> to vector<16x1xf32>
    %cst_109 = arith.constant 3.200000e+01 : f32
    %285 = vector.broadcast %cst_109 : f32 to vector<16x1xf32>
    %286 = arith.divf %284, %285 : vector<16x1xf32>
    %287 = vector.broadcast %286 : vector<16x1xf32> to vector<16x32xf32>
    %288 = arith.subf %282, %287 : vector<16x32xf32>
    %289 = arith.mulf %288, %288 : vector<16x32xf32>
    %cst_110 = arith.constant dense<0.000000e+00> : vector<16xf32>
    %290 = vector.multi_reduction <add>, %289, %cst_110 [1] : vector<16x32xf32> to vector<16xf32>
    %291 = vector.shape_cast %290 : vector<16xf32> to vector<16x1xf32>
    %cst_111 = arith.constant 0.0322580636 : f32
    %292 = vector.broadcast %cst_111 : f32 to vector<16x1xf32>
    %293 = arith.mulf %291, %292 : vector<16x1xf32>
    %294 = vector.broadcast %196 : vector<1x32xf32> to vector<16x32xf32>
    %295 = arith.mulf %294, %288 : vector<16x32xf32>
    %296 = math.sqrt %293 : vector<16x1xf32>
    %cst_112 = arith.constant 9.99999997E-7 : f32
    %297 = vector.broadcast %cst_112 : f32 to vector<16x1xf32>
    %298 = arith.addf %296, %297 : vector<16x1xf32>
    %299 = tpu.reciprocal %298 {approx = true} : vector<16x1xf32> -> vector<16x1xf32>
    %300 = arith.mulf %298, %299 : vector<16x1xf32>
    %cst_113 = arith.constant 2.000000e+00 : f32
    %301 = vector.broadcast %cst_113 : f32 to vector<16x1xf32>
    %302 = arith.subf %301, %300 : vector<16x1xf32>
    %303 = arith.mulf %299, %302 : vector<16x1xf32>
    %304 = vector.broadcast %303 : vector<16x1xf32> to vector<16x32xf32>
    %305 = arith.mulf %295, %304 : vector<16x32xf32>
    %306 = vector.broadcast %197 : vector<1x32xf32> to vector<16x32xf32>
    %307 = arith.addf %305, %306 : vector<16x32xf32>
    %cst_114 = arith.constant dense<0.000000e+00> : vector<16x128xf32>
    %308 = tpu.matmul %307, %186, %cst_114 {dimension_numbers = #tpu.dot_dimension_numbers<[1], [0], [0], [1], [0, 0, 1, 1], [], []>} : vector<16x32xf32>, vector<32x128xf32>, vector<16x128xf32> -> vector<16x128xf32>
    %309 = vector.broadcast %188 : vector<1x128xf32> to vector<16x128xf32>
    %310 = arith.addf %308, %309 : vector<16x128xf32>
    %cst_115 = arith.constant 5.000000e-01 : f32
    %311 = vector.broadcast %cst_115 : f32 to vector<16x128xf32>
    %312 = arith.mulf %311, %310 : vector<16x128xf32>
    %cst_116 = arith.constant 4.471500e-02 : f32
    %313 = vector.broadcast %cst_116 : f32 to vector<16x128xf32>
    %314 = arith.mulf %313, %310 : vector<16x128xf32>
    %315 = arith.mulf %314, %310 : vector<16x128xf32>
    %316 = arith.mulf %315, %310 : vector<16x128xf32>
    %317 = arith.addf %310, %316 : vector<16x128xf32>
    %cst_117 = arith.constant 0.797884583 : f32
    %318 = vector.broadcast %cst_117 : f32 to vector<16x128xf32>
    %319 = arith.mulf %318, %317 : vector<16x128xf32>
    %320 = math.tanh %319 : vector<16x128xf32>
    %cst_118 = arith.constant 1.000000e+00 : f32
    %321 = vector.broadcast %cst_118 : f32 to vector<16x128xf32>
    %322 = arith.addf %321, %320 : vector<16x128xf32>
    %323 = arith.mulf %312, %322 : vector<16x128xf32>
    %cst_119 = arith.constant dense<0.000000e+00> : vector<16x32xf32>
    %324 = tpu.matmul %323, %187, %cst_119 {dimension_numbers = #tpu.dot_dimension_numbers<[1], [1], [0], [0], [0, 0, 1, 0], [], []>} : vector<16x128xf32>, vector<32x128xf32>, vector<16x32xf32> -> vector<16x32xf32>
    %325 = arith.addf %282, %324 : vector<16x32xf32>
    %326 = vector.broadcast %195 : vector<1x32xf32> to vector<16x32xf32>
    %327 = arith.addf %325, %326 : vector<16x32xf32>
    %c0_120 = arith.constant 0 : index
    %c0_121 = arith.constant 0 : index
    %328 = vector.load %arg8[%c0_120, %c0_121] : memref<16x32xf32, #tpu.memory_space<vmem>>, vector<16x32xf32>
    tpu.vector_store %arg8[%c0_120, %c0_121], %327 {strides = array<i32>} : memref<16x32xf32, #tpu.memory_space<vmem>>, vector<16x32xf32>,
    return
  }
  func.func @transform_0(%arg0: i32) -> (i32, i32) {
    %c0_i32 = arith.constant 0 : i32
    %c0_i32_0 = arith.constant 0 : i32
    return %arg0, %c0_i32 : i32, i32
  }
  func.func @transform_1(%arg0: i32) -> (i32, i32) {
    %c0_i32 = arith.constant 0 : i32
    %c0_i32_0 = arith.constant 0 : i32
    return %c0_i32, %arg0 : i32, i32
  }
  func.func @transform_2(%arg0: i32) -> (i32, i32) {
    %c0_i32 = arith.constant 0 : i32
    %c0_i32_0 = arith.constant 0 : i32
    %c0_i32_1 = arith.constant 0 : i32
    return %c0_i32, %c0_i32_0 : i32, i32
  }
  func.func @transform_3(%arg0: i32) -> (i32, i32) {
    %c0_i32 = arith.constant 0 : i32
    %c0_i32_0 = arith.constant 0 : i32
    %c0_i32_1 = arith.constant 0 : i32
    return %c0_i32, %c0_i32_0 : i32, i32
  }
  func.func @transform_4(%arg0: i32) -> (i32, i32) {
    %c0_i32 = arith.constant 0 : i32
    %c0_i32_0 = arith.constant 0 : i32
    %c0_i32_1 = arith.constant 0 : i32
    return %c0_i32, %c0_i32_0 : i32, i32
  }
  func.func @transform_5(%arg0: i32) -> (i32, i32) {
    %c0_i32 = arith.constant 0 : i32
    %c0_i32_0 = arith.constant 0 : i32
    %c0_i32_1 = arith.constant 0 : i32
    return %c0_i32, %c0_i32_0 : i32, i32
  }
  func.func @transform_6(%arg0: i32) -> (i32, i32) {
    %c0_i32 = arith.constant 0 : i32
    %c0_i32_0 = arith.constant 0 : i32
    %c0_i32_1 = arith.constant 0 : i32
    return %c0_i32, %c0_i32_0 : i32, i32
  }
  func.func @transform_7(%arg0: i32) -> (i32, i32) {
    %c0_i32 = arith.constant 0 : i32
    %c0_i32_0 = arith.constant 0 : i32
    return %arg0, %c0_i32 : i32, i32
  }
}

</mosaic_0001>

<llo_original>
// kernel: bert_forward.1
$region0: #{bert_forward.1}
  #allocation0 [shape = 'u32[]', space=smem, size = 0x4, offset = 0x4, fixed_abs, tag = 'smem constant byte address 0x4 - core index']
  #allocation1 [shape = 'u32[144,128]{1,0:T(1,128)}', space=vmem, size = 0x12000, scoped, tag = 'internal scratch']
  %s0 = inlined_call_operand.vmem [shape: s32[16,4], index: 0, kind: input, shape index: {}]
  %s1 = inlined_call_operand.vmem [shape: s32[1,16], index: 1, kind: input, shape index: {}]
  %s2 = inlined_call_operand.vmem [shape: f32[48,32], index: 2, kind: input, shape index: {}]
  %s3 = inlined_call_operand.vmem [shape: f32[256,32], index: 3, kind: input, shape index: {}]
  %s4 = inlined_call_operand.vmem [shape: f32[128,128], index: 4, kind: input, shape index: {}]
  %s5 = inlined_call_operand.vmem [shape: f32[18,32], index: 5, kind: input, shape index: {}]
  %s6 = inlined_call_operand.vmem [shape: f32[2,128], index: 6, kind: input, shape index: {}]
  %s7 = inlined_call_operand.hbm [shape: f32[16,32], index: 7, kind: output, shape index: {}]
  %s8 = sld [smem:[#allocation0]]
  $region38: #{bert_forward.1} parent=0
    _
  %s10 = ssub.s32 1, %s8
  %s11 = scalar_select 0, %s10, %s8
  $region1: #{bert_forward.1} parent=0
    #allocation2 [shape = 'u8[8192]{0}', space=vmem, size = 0x2000, scoped, tag = 'output window, operand 0, single buffered']
    #allocation3 [shape = 's32[1]{0}', space=sflag, size = 0x4, scoped, tag = 'scoped memory for bert_forward.1']
    %12 = vsyncpa [#allocation3], 0
    // Predicated region
    $region2: #{bert_forward.1} parent=1 // pred_check
      _
    $region3: #{bert_forward.1} parent=1 // pred_check_branch
      %14 = sbr.rel (0) target = $region5
    $region4: #{bert_forward.1} parent=1 // pred_region
      _
    $region5: #{bert_forward.1} parent=1 // pred_fallthru
      _
    // Predicated region
    $region6: #{bert_forward.1} parent=1 // pred_check
      _
    $region7: #{bert_forward.1} parent=1 // pred_check_branch
      %16 = sbr.rel (0) target = $region9
    $region8: #{bert_forward.1} parent=1 // pred_region
      _
    $region9: #{bert_forward.1} parent=1 // pred_fallthru
      _
    // Predicated region
    $region10: #{bert_forward.1} parent=1 // pred_check
      _
    $region11: #{bert_forward.1} parent=1 // pred_check_branch
      %18 = sbr.rel (0) target = $region13
    $region12: #{bert_forward.1} parent=1 // pred_region
      _
    $region13: #{bert_forward.1} parent=1 // pred_fallthru
      _
    // Predicated region
    $region14: #{bert_forward.1} parent=1 // pred_check
      _
    $region15: #{bert_forward.1} parent=1 // pred_check_branch
      %20 = sbr.rel (0) target = $region17
    $region16: #{bert_forward.1} parent=1 // pred_region
      _
    $region17: #{bert_forward.1} parent=1 // pred_fallthru
      _
    // Predicated region
    $region18: #{bert_forward.1} parent=1 // pred_check
      _
    $region19: #{bert_forward.1} parent=1 // pred_check_branch
      %22 = sbr.rel (0) target = $region21
    $region20: #{bert_forward.1} parent=1 // pred_region
      _
    $region21: #{bert_forward.1} parent=1 // pred_fallthru
      _
    // Predicated region
    $region22: #{bert_forward.1} parent=1 // pred_check
      _
    $region23: #{bert_forward.1} parent=1 // pred_check_branch
      %24 = sbr.rel (0) target = $region25
    $region24: #{bert_forward.1} parent=1 // pred_region
      _
    $region25: #{bert_forward.1} parent=1 // pred_fallthru
      _
    // Predicated region
    $region26: #{bert_forward.1} parent=1 // pred_check
      _
    $region27: #{bert_forward.1} parent=1 // pred_check_branch
      %26 = sbr.rel (0) target = $region29
    $region28: #{bert_forward.1} parent=1 // pred_region
      _
    $region29: #{bert_forward.1} parent=1 // pred_fallthru
      _
    %v27 = vld [vmem:[%s0] sm:$0xff]
    %v28 = vld [vmem:[%s0 + $0x8] sm:$0xff]
    %v29 = vlaneseq
    %v30 = vand.u32 %v29, 127
    %31 = vset.pattern.permute.xlu0 0
    %32 = vperm.xlu0 %31, %v27
    %v33 = vpop.permute.xlu0 %32
    %34 = vset.pattern.permute.xlu0 0
    %35 = vperm.xlu0 %34, %v28
    %v36 = vpop.permute.xlu0 %35
    %vm37 = vcmp.eq.s32.totalorder %v30, %v33
    %vm38 = vcmp.eq.s32.totalorder %v30, %v36
    %39 = vset.pattern.permute.xlu0 1
    %40 = vperm.xlu0 %39, %v27
    %v41 = vpop.permute.xlu0 %40
    %42 = vset.pattern.permute.xlu0 1
    %43 = vperm.xlu0 %42, %v28
    %v44 = vpop.permute.xlu0 %43
    %vm45 = vcmp.eq.s32.totalorder %v30, %v41
    %vm46 = vcmp.eq.s32.totalorder %v30, %v44
    %vm47 = vmor %vm37, %vm45
    %vm48 = vmor %vm38, %vm46
    %49 = vset.pattern.permute.xlu0 2
    %50 = vperm.xlu0 %49, %v27
    %v51 = vpop.permute.xlu0 %50
    %52 = vset.pattern.permute.xlu0 2
    %53 = vperm.xlu0 %52, %v28
    %v54 = vpop.permute.xlu0 %53
    %vm55 = vcmp.eq.s32.totalorder %v30, %v51
    %vm56 = vcmp.eq.s32.totalorder %v30, %v54
    %vm57 = vmor %vm47, %vm55
    %vm58 = vmor %vm48, %vm56
    %v59 = vsel %vm57, 1, 0
    %v60 = vsel %vm58, 1, 0
    %v61 = vcvt.s32.f32 %v59
    %v62 = vcvt.s32.f32 %v60
    %v63 = vld [vmem:[%s2] sm:$0xff]
    %v64 = vld [vmem:[%s2 + $0x8] sm:$0xff]
    %v65 = vld [vmem:[%s2 + $0x10] sm:$0xff]
    %v66 = vld [vmem:[%s2 + $0x18] sm:$0xff]
    %v67 = vld [vmem:[%s2 + $0x20] sm:$0xff]
    %v68 = vld [vmem:[%s2 + $0x28] sm:$0xff]
    %vm69 = vcmask 392192
    %v71 = vsel %vm69, %v61, 0
    %v74 = vsel %vm69, %v62, 0
    %76 = vmatprep.subr.mxu0 0.0
    %77 = vmatpush1.msra.mxu0 %v63
    %78 = vmatprep.subr.mxu0 0.0
    %79 = vmatpush1.msra.mxu0 %v64
    %80 = vmatprep.subr.mxu0 0.0
    %81 = vmatpush1.msra.mxu0 %v65
    %82 = vmatprep.subr.mxu0 0.0
    %83 = vmatpush1.msra.mxu0 %v66
    %84 = vmatprep.subr.mxu0 0.0
    %85 = vmatpush1.msra.mxu0 %v67
    %86 = vmatprep.subr.mxu0 0.0
    %87 = vmatpush1.msra.mxu0 %v68
    %88 = vmatprep.subr.mxu0 0.0
    %89 = vmatpush1.msra.mxu0 0.0
    %90 = vmatprep.subr.mxu0 0.0
    %91 = vmatpush1.msra.mxu0 0.0
    %92 = vmatprep.subr.mxu0 0.0
    %93 = vmatpush1.msra.mxu0 0.0
    %94 = vmatprep.subr.mxu0 0.0
    %95 = vmatpush1.msra.mxu0 0.0
    %96 = vmatprep.subr.mxu0 0.0
    %97 = vmatpush1.msra.mxu0 0.0
    %98 = vmatprep.subr.mxu0 0.0
    %99 = vmatpush1.msra.mxu0 0.0
    %100 = vmatprep.subr.mxu0 0.0
    %101 = vmatpush1.msra.mxu0 0.0
    %102 = vmatprep.subr.mxu0 0.0
    %103 = vmatpush1.msra.mxu0 0.0
    %104 = vmatprep.subr.mxu0 0.0
    %105 = vmatpush1.msra.mxu0 0.0
    %106 = vmatprep.subr.mxu0 0.0
    %107 = vmatpush1.msra.mxu0 0.0
    %108 = vmatprep.subr.mxu0 0.0
    %109 = vmatpush1.msra.mxu0 0.0
    %110 = vmatprep.subr.mxu0 0.0
    %111 = vmatpush1.msra.mxu0 0.0
    %112 = vmatprep.subr.mxu0 0.0
    %113 = vmatpush1.msra.mxu0 0.0
    %114 = vmatprep.subr.mxu0 0.0
    %115 = vmatpush1.msra.mxu0 0.0
    %116 = vmatprep.subr.mxu0 0.0
    %117 = vmatpush1.msra.mxu0 0.0
    %118 = vmatprep.subr.mxu0 0.0
    %119 = vmatpush1.msra.mxu0 0.0
    %120 = vmatprep.subr.mxu0 0.0
    %121 = vmatpush1.msra.mxu0 0.0
    %122 = vmatprep.subr.mxu0 0.0
    %123 = vmatpush1.msra.mxu0 0.0
    %124 = vmatprep.subr.mxu0 0.0
    %125 = vmatpush1.msra.mxu0 0.0
    %126 = vmatprep.subr.mxu0 0.0
    %127 = vmatpush1.msra.mxu0 0.0
    %128 = vmatprep.subr.mxu0 0.0
    %129 = vmatpush1.msra.mxu0 0.0
    %130 = vmatprep.subr.mxu0 0.0
    %131 = vmatpush1.msra.mxu0 0.0
    %132 = vmatprep.subr.mxu0 0.0
    %133 = vmatpush1.msra.mxu0 0.0
    %134 = vmatprep.subr.mxu0 0.0
    %135 = vmatpush1.msra.mxu0 0.0
    %136 = vmatprep.subr.mxu0 0.0
    %137 = vmatpush1.msra.mxu0 0.0
    %138 = vmatprep.subr.mxu0 0.0
    %139 = vmatpush1.msra.mxu0 0.0
    %140 = vmatprep.mubr.f32.mxu0 0.0
    %141 = vmatmul.mubr.f32.gmra.mrb[0].mxu0 %v71
    %v142 = vpop.f32.mrb[0].mxu0
    %v143 = vadd.f32 0.0, %v142
    %v144 = vpop.f32.mrb[0].mxu0
    %145 = vmatprep.mubr.f32.mxu0 0.0
    %146 = vmatmul.mubr.f32.gmra.mrb[0].mxu0 %v74
    %v147 = vpop.f32.mrb[0].mxu0
    %v148 = vadd.f32 0.0, %v147
    %v149 = vpop.f32.mrb[0].mxu0
    %150 = vdwg.mxu0
    %v151 = vld [vmem:[%s1] sm:$0x1]
    %152 = vset.pattern.permute.xlu0 3
    %153 = vperm.xlu0 %152, %v27
    %v154 = vpop.permute.xlu0 %153
    %155 = vset.pattern.permute.xlu0 3
    %156 = vperm.xlu0 %155, %v28
    %v157 = vpop.permute.xlu0 %156
    %v158 = vlaneseq
    %v159 = vshrl.u32 %v158, 7
    %v160 = vsub.s32 0, %v159
    %v161 = vrot.slane %v151, %v160
    %vm162 = vcmp.eq.s32.totalorder %v154, %v161
    %vm163 = vcmp.eq.s32.totalorder %v157, %v161
    %v164 = vsel %vm162, 0.0, -1e+09
    %v165 = vsel %vm163, 0.0, -1e+09
    %vm166 = vcmp.ge.s32.totalorder %v30, 0
    %vm167 = vcmp.lt.s32.totalorder %v30, 16
    %vm168 = vmand %vm166, %vm167
    %vm169 = vcmp.ge.s32.totalorder %v30, 16
    %vm170 = vcmp.lt.s32.totalorder %v30, 32
    %vm171 = vmand %vm169, %vm170
    %v172 = vld [vmem:[%s3] sm:$0xff]
    %v173 = vld [vmem:[%s3 + $0x8] sm:$0xff]
    %v174 = vld [vmem:[%s3 + $0x10] sm:$0xff]
    %v175 = vld [vmem:[%s3 + $0x18] sm:$0xff]
    %v176 = vld [vmem:[%s3 + $0x20] sm:$0xff]
    %v177 = vld [vmem:[%s3 + $0x28] sm:$0xff]
    %v178 = vld [vmem:[%s3 + $0x30] sm:$0xff]
    %v179 = vld [vmem:[%s3 + $0x38] sm:$0xff]
    %v180 = vld [vmem:[%s3 + $0x40] sm:$0xff]
    %v181 = vld [vmem:[%s3 + $0x48] sm:$0xff]
    %v182 = vld [vmem:[%s3 + $0x50] sm:$0xff]
    %v183 = vld [vmem:[%s3 + $0x58] sm:$0xff]
    %v184 = vld [vmem:[%s3 + $0x60] sm:$0xff]
    %v185 = vld [vmem:[%s3 + $0x68] sm:$0xff]
    %v186 = vld [vmem:[%s3 + $0x70] sm:$0xff]
    %v187 = vld [vmem:[%s3 + $0x78] sm:$0xff]
    %v188 = vld [vmem:[%s4] sm:$0xff]
    %v189 = vld [vmem:[%s4 + $0x8] sm:$0xff]
    %v190 = vld [vmem:[%s4 + $0x10] sm:$0xff]
    %v191 = vld [vmem:[%s4 + $0x18] sm:$0xff]
    %v192 = vld [vmem:[%s4 + $0x20] sm:$0xff]
    %v193 = vld [vmem:[%s4 + $0x28] sm:$0xff]
    %v194 = vld [vmem:[%s4 + $0x30] sm:$0xff]
    %v195 = vld [vmem:[%s4 + $0x38] sm:$0xff]
    %v196 = vld [vmem:[%s6] sm:$0x1]
    %v197 = vld [vmem:[%s5] sm:$0x1]
    %v198 = vld [vmem:[%s5 + $0x1] sm:$0x1]
    %v199 = vld [vmem:[%s5 + $0x2] sm:$0x1]
    %v200 = vld [vmem:[%s5 + $0x3] sm:$0x1]
    %v201 = vld [vmem:[%s5 + $0x4] sm:$0x1]
    %v202 = vld [vmem:[%s5 + $0x5] sm:$0x1]
    %v203 = vld [vmem:[%s5 + $0x6] sm:$0x1]
    %v204 = vld [vmem:[%s5 + $0x7] sm:$0x1]
    %v205 = vld [vmem:[%s5 + $0x8] sm:$0x1]
    %vm206 = vcmask 261120
    %v207 = vsel %vm206, %v143, 0.0
    %208 = vadd.xlane.f32.xlu0 %v207
    %v209 = vpop.xlane.xlu0 %208
    %v210 = vsel %vm206, %v148, 0.0
    %211 = vadd.xlane.f32.xlu0 %v210
    %v212 = vpop.xlane.xlu0 %211
    %v213 = vrcp.pop 32.0
    %v214 = vmul.f32 %v209, %v213
    %v215 = vmul.f32 %v212, %v213
    %v216 = vsub.f32 %v143, %v214
    %v217 = vsub.f32 %v148, %v215
    %v218 = vmul.f32 %v216, %v216
    %v219 = vmul.f32 %v217, %v217
    %v220 = vsel %vm206, %v218, 0.0
    %221 = vadd.xlane.f32.xlu0 %v220
    %v222 = vpop.xlane.xlu0 %221
    %v223 = vsel %vm206, %v219, 0.0
    %224 = vadd.xlane.f32.xlu0 %v223
    %v225 = vpop.xlane.xlu0 %224
    %v226 = vmul.f32 %v222, 0.032258064
    %v227 = vmul.f32 %v225, 0.032258064
    %v228 = vlaneseq
    %v229 = vshrl.u32 %v228, 7
    %v230 = vsub.s32 0, %v229
    %v231 = vrot.slane %v201, %v230
    %v232 = vmul.f32 %v231, %v216
    %v233 = vmul.f32 %v231, %v217
    %v234 = vrsqrt.pop %v226
    %v235 = vmul.f32 %v226, %v234
    %vm236 = vcmp.eq.f32.partialorder %v226, inf
    %v237 = vsel %vm236, %v226, %v235
    %vm238 = vcmp.eq.f32.partialorder %v226, 0.0
    %v239 = vand.u32 %v226, 2147483648
    %v240 = vsel %vm238, %v239, %v237
    %v241 = vrsqrt.pop %v227
    %v242 = vmul.f32 %v227, %v241
    %vm243 = vcmp.eq.f32.partialorder %v227, inf
    %v244 = vsel %vm243, %v227, %v242
    %vm245 = vcmp.eq.f32.partialorder %v227, 0.0
    %v246 = vand.u32 %v227, 2147483648
    %v247 = vsel %vm245, %v246, %v244
    %v248 = vadd.f32 %v240, 1e-06
    %v249 = vadd.f32 %v247, 1e-06
    %v250 = vrcp.pop %v248
    %v251 = vrcp.pop %v249
    %v252 = vmul.f32 %v248, %v250
    %v253 = vmul.f32 %v249, %v251
    %v254 = vsub.f32 2.0, %v252
    %v255 = vsub.f32 2.0, %v253
    %v256 = vmul.f32 %v250, %v254
    %v257 = vmul.f32 %v251, %v255
    %v258 = vmul.f32 %v232, %v256
    %v259 = vmul.f32 %v233, %v257
    %v260 = vlaneseq
    %v261 = vshrl.u32 %v260, 7
    %v262 = vsub.s32 0, %v261
    %v263 = vrot.slane %v202, %v262
    %v264 = vadd.f32 %v258, %v263
    %v265 = vadd.f32 %v259, %v263
    %v266 = vlaneseq
    %v267 = vshrl.u32 %v266, 7
    %v268 = vsub.s32 0, %v267
    %v269 = vrot.slane %v197, %v268
    %v271 = vsel %vm206, %v264, 0
    %v274 = vsel %vm206, %v265, 0
    %276 = vmatprep.subr.mxu0 0.0
    %277 = vmatpush1.msra.mxu0 %v172
    %278 = vmatprep.subr.mxu0 0.0
    %279 = vmatpush1.msra.mxu0 %v173
    %280 = vmatprep.subr.mxu0 0.0
    %281 = vmatpush1.msra.mxu0 %v174
    %282 = vmatprep.subr.mxu0 0.0
    %283 = vmatpush1.msra.mxu0 %v175
    %284 = vmatprep.subr.mxu0 0.0
    %285 = vmatpush1.msra.mxu0 0.0
    %286 = vmatprep.subr.mxu0 0.0
    %287 = vmatpush1.msra.mxu0 0.0
    %288 = vmatprep.subr.mxu0 0.0
    %289 = vmatpush1.msra.mxu0 0.0
    %290 = vmatprep.subr.mxu0 0.0
    %291 = vmatpush1.msra.mxu0 0.0
    %292 = vmatprep.subr.mxu0 0.0
    %293 = vmatpush1.msra.mxu0 0.0
    %294 = vmatprep.subr.mxu0 0.0
    %295 = vmatpush1.msra.mxu0 0.0
    %296 = vmatprep.subr.mxu0 0.0
    %297 = vmatpush1.msra.mxu0 0.0
    %298 = vmatprep.subr.mxu0 0.0
    %299 = vmatpush1.msra.mxu0 0.0
    %300 = vmatprep.subr.mxu0 0.0
    %301 = vmatpush1.msra.mxu0 0.0
    %302 = vmatprep.subr.mxu0 0.0
    %303 = vmatpush1.msra.mxu0 0.0
    %304 = vmatprep.subr.mxu0 0.0
    %305 = vmatpush1.msra.mxu0 0.0
    %306 = vmatprep.subr.mxu0 0.0
    %307 = vmatpush1.msra.mxu0 0.0
    %308 = vmatprep.subr.mxu0 0.0
    %309 = vmatpush1.msra.mxu0 0.0
    %310 = vmatprep.subr.mxu0 0.0
    %311 = vmatpush1.msra.mxu0 0.0
    %312 = vmatprep.subr.mxu0 0.0
    %313 = vmatpush1.msra.mxu0 0.0
    %314 = vmatprep.subr.mxu0 0.0
    %315 = vmatpush1.msra.mxu0 0.0
    %316 = vmatprep.subr.mxu0 0.0
    %317 = vmatpush1.msra.mxu0 0.0
    %318 = vmatprep.subr.mxu0 0.0
    %319 = vmatpush1.msra.mxu0 0.0
    %320 = vmatprep.subr.mxu0 0.0
    %321 = vmatpush1.msra.mxu0 0.0
    %322 = vmatprep.subr.mxu0 0.0
    %323 = vmatpush1.msra.mxu0 0.0
    %324 = vmatprep.subr.mxu0 0.0
    %325 = vmatpush1.msra.mxu0 0.0
    %326 = vmatprep.subr.mxu0 0.0
    %327 = vmatpush1.msra.mxu0 0.0
    %328 = vmatprep.subr.mxu0 0.0
    %329 = vmatpush1.msra.mxu0 0.0
    %330 = vmatprep.subr.mxu0 0.0
    %331 = vmatpush1.msra.mxu0 0.0
    %332 = vmatprep.subr.mxu0 0.0
    %333 = vmatpush1.msra.mxu0 0.0
    %334 = vmatprep.subr.mxu0 0.0
    %335 = vmatpush1.msra.mxu0 0.0
    %336 = vmatprep.subr.mxu0 0.0
    %337 = vmatpush1.msra.mxu0 0.0
    %338 = vmatprep.subr.mxu0 0.0
    %339 = vmatpush1.msra.mxu0 0.0
    %340 = vmatprep.mubr.f32.mxu0 0.0
    %341 = vmatmul.mubr.f32.gmra.mrb[0].mxu0 %v271
    %v342 = vpop.f32.mrb[0].mxu0
    %v343 = vadd.f32 %v269, %v342
    %v344 = vpop.f32.mrb[0].mxu0
    %345 = vmatprep.mubr.f32.mxu0 0.0
    %346 = vmatmul.mubr.f32.gmra.mrb[0].mxu0 %v274
    %v347 = vpop.f32.mrb[0].mxu0
    %v348 = vadd.f32 %v269, %v347
    %v349 = vpop.f32.mrb[0].mxu0
    %350 = vdwg.mxu0
    %v351 = vlaneseq
    %v352 = vshrl.u32 %v351, 7
    %v353 = vsub.s32 0, %v352
    %v354 = vrot.slane %v198, %v353
    %355 = vmatprep.subr.mxu0 0.0
    %356 = vmatpush1.msra.mxu0 %v176
    %357 = vmatprep.subr.mxu0 0.0
    %358 = vmatpush1.msra.mxu0 %v177
    %359 = vmatprep.subr.mxu0 0.0
    %360 = vmatpush1.msra.mxu0 %v178
    %361 = vmatprep.subr.mxu0 0.0
    %362 = vmatpush1.msra.mxu0 %v179
    %363 = vmatprep.subr.mxu0 0.0
    %364 = vmatpush1.msra.mxu0 0.0
    %365 = vmatprep.subr.mxu0 0.0
    %366 = vmatpush1.msra.mxu0 0.0
    %367 = vmatprep.subr.mxu0 0.0
    %368 = vmatpush1.msra.mxu0 0.0
    %369 = vmatprep.subr.mxu0 0.0
    %370 = vmatpush1.msra.mxu0 0.0
    %371 = vmatprep.subr.mxu0 0.0
    %372 = vmatpush1.msra.mxu0 0.0
    %373 = vmatprep.subr.mxu0 0.0
    %374 = vmatpush1.msra.mxu0 0.0
    %375 = vmatprep.subr.mxu0 0.0
    %376 = vmatpush1.msra.mxu0 0.0
    %377 = vmatprep.subr.mxu0 0.0
    %378 = vmatpush1.msra.mxu0 0.0
    %379 = vmatprep.subr.mxu0 0.0
    %380 = vmatpush1.msra.mxu0 0.0
    %381 = vmatprep.subr.mxu0 0.0
    %382 = vmatpush1.msra.mxu0 0.0
    %383 = vmatprep.subr.mxu0 0.0
    %384 = vmatpush1.msra.mxu0 0.0
    %385 = vmatprep.subr.mxu0 0.0
    %386 = vmatpush1.msra.mxu0 0.0
    %387 = vmatprep.subr.mxu0 0.0
    %388 = vmatpush1.msra.mxu0 0.0
    %389 = vmatprep.subr.mxu0 0.0
    %390 = vmatpush1.msra.mxu0 0.0
    %391 = vmatprep.subr.mxu0 0.0
    %392 = vmatpush1.msra.mxu0 0.0
    %393 = vmatprep.subr.mxu0 0.0
    %394 = vmatpush1.msra.mxu0 0.0
    %395 = vmatprep.subr.mxu0 0.0
    %396 = vmatpush1.msra.mxu0 0.0
    %397 = vmatprep.subr.mxu0 0.0
    %398 = vmatpush1.msra.mxu0 0.0
    %399 = vmatprep.subr.mxu0 0.0
    %400 = vmatpush1.msra.mxu0 0.0
    %401 = vmatprep.subr.mxu0 0.0
    %402 = vmatpush1.msra.mxu0 0.0
    %403 = vmatprep.subr.mxu0 0.0
    %404 = vmatpush1.msra.mxu0 0.0
    %405 = vmatprep.subr.mxu0 0.0
    %406 = vmatpush1.msra.mxu0 0.0
    %407 = vmatprep.subr.mxu0 0.0
    %408 = vmatpush1.msra.mxu0 0.0
    %409 = vmatprep.subr.mxu0 0.0
    %410 = vmatpush1.msra.mxu0 0.0
    %411 = vmatprep.subr.mxu0 0.0
    %412 = vmatpush1.msra.mxu0 0.0
    %413 = vmatprep.subr.mxu0 0.0
    %414 = vmatpush1.msra.mxu0 0.0
    %415 = vmatprep.subr.mxu0 0.0
    %416 = vmatpush1.msra.mxu0 0.0
    %417 = vmatprep.subr.mxu0 0.0
    %418 = vmatpush1.msra.mxu0 0.0
    %419 = vmatprep.mubr.f32.mxu0 0.0
    %420 = vmatmul.mubr.f32.gmra.mrb[0].mxu0 %v271
    %v421 = vpop.f32.mrb[0].mxu0
    %v422 = vadd.f32 %v354, %v421
    %v423 = vpop.f32.mrb[0].mxu0
    %424 = vmatprep.mubr.f32.mxu0 0.0
    %425 = vmatmul.mubr.f32.gmra.mrb[0].mxu0 %v274
    %v426 = vpop.f32.mrb[0].mxu0
    %v427 = vadd.f32 %v354, %v426
    %v428 = vpop.f32.mrb[0].mxu0
    %429 = vdwg.mxu0
    %v430 = vlaneseq
    %v431 = vshrl.u32 %v430, 7
    %v432 = vsub.s32 0, %v431
    %v433 = vrot.slane %v199, %v432
    %434 = vmatprep.subr.mxu0 0.0
    %435 = vmatpush1.msra.mxu0 %v180
    %436 = vmatprep.subr.mxu0 0.0
    %437 = vmatpush1.msra.mxu0 %v181
    %438 = vmatprep.subr.mxu0 0.0
    %439 = vmatpush1.msra.mxu0 %v182
    %440 = vmatprep.subr.mxu0 0.0
    %441 = vmatpush1.msra.mxu0 %v183
    %442 = vmatprep.subr.mxu0 0.0
    %443 = vmatpush1.msra.mxu0 0.0
    %444 = vmatprep.subr.mxu0 0.0
    %445 = vmatpush1.msra.mxu0 0.0
    %446 = vmatprep.subr.mxu0 0.0
    %447 = vmatpush1.msra.mxu0 0.0
    %448 = vmatprep.subr.mxu0 0.0
    %449 = vmatpush1.msra.mxu0 0.0
    %450 = vmatprep.subr.mxu0 0.0
    %451 = vmatpush1.msra.mxu0 0.0
    %452 = vmatprep.subr.mxu0 0.0
    %453 = vmatpush1.msra.mxu0 0.0
    %454 = vmatprep.subr.mxu0 0.0
    %455 = vmatpush1.msra.mxu0 0.0
    %456 = vmatprep.subr.mxu0 0.0
    %457 = vmatpush1.msra.mxu0 0.0
    %458 = vmatprep.subr.mxu0 0.0
    %459 = vmatpush1.msra.mxu0 0.0
    %460 = vmatprep.subr.mxu0 0.0
    %461 = vmatpush1.msra.mxu0 0.0
    %462 = vmatprep.subr.mxu0 0.0
    %463 = vmatpush1.msra.mxu0 0.0
    %464 = vmatprep.subr.mxu0 0.0
    %465 = vmatpush1.msra.mxu0 0.0
    %466 = vmatprep.subr.mxu0 0.0
    %467 = vmatpush1.msra.mxu0 0.0
    %468 = vmatprep.subr.mxu0 0.0
    %469 = vmatpush1.msra.mxu0 0.0
    %470 = vmatprep.subr.mxu0 0.0
    %471 = vmatpush1.msra.mxu0 0.0
    %472 = vmatprep.subr.mxu0 0.0
    %473 = vmatpush1.msra.mxu0 0.0
    %474 = vmatprep.subr.mxu0 0.0
    %475 = vmatpush1.msra.mxu0 0.0
    %476 = vmatprep.subr.mxu0 0.0
    %477 = vmatpush1.msra.mxu0 0.0
    %478 = vmatprep.subr.mxu0 0.0
    %479 = vmatpush1.msra.mxu0 0.0
    %480 = vmatprep.subr.mxu0 0.0
    %481 = vmatpush1.msra.mxu0 0.0
    %482 = vmatprep.subr.mxu0 0.0
    %483 = vmatpush1.msra.mxu0 0.0
    %484 = vmatprep.subr.mxu0 0.0
    %485 = vmatpush1.msra.mxu0 0.0
    %486 = vmatprep.subr.mxu0 0.0
    %487 = vmatpush1.msra.mxu0 0.0
    %488 = vmatprep.subr.mxu0 0.0
    %489 = vmatpush1.msra.mxu0 0.0
    %490 = vmatprep.subr.mxu0 0.0
    %491 = vmatpush1.msra.mxu0 0.0
    %492 = vmatprep.subr.mxu0 0.0
    %493 = vmatpush1.msra.mxu0 0.0
    %494 = vmatprep.subr.mxu0 0.0
    %495 = vmatpush1.msra.mxu0 0.0
    %496 = vmatprep.subr.mxu0 0.0
    %497 = vmatpush1.msra.mxu0 0.0
    %498 = vmatprep.mubr.f32.mxu0 0.0
    %499 = vmatmul.mubr.f32.gmra.mrb[0].mxu0 %v271
    %v500 = vpop.f32.mrb[0].mxu0
    %v501 = vadd.f32 %v433, %v500
    %v502 = vpop.f32.mrb[0].mxu0
    %503 = vmatprep.mubr.f32.mxu0 0.0
    %504 = vmatmul.mubr.f32.gmra.mrb[0].mxu0 %v274
    %v505 = vpop.f32.mrb[0].mxu0
    %v506 = vadd.f32 %v433, %v505
    %v507 = vpop.f32.mrb[0].mxu0
    %508 = vdwg.mxu0
    %v509 = vsel %vm168, 1, 0
    %vm510 = vcmp.eq.s32.totalorder %v509, 1
    %v511 = vsel %vm510, %v343, 0.0
    %v512 = vsel %vm510, %v348, 0.0
    %v514 = vsel %vm206, %v511, 0
    %v517 = vsel %vm206, %v512, 0
    %v520 = vsel %vm206, %v422, 0
    %v523 = vsel %vm206, %v427, 0
    %525 = vmatprep.subr.mxu0 0.0
    %526 = vmatpush1.xpose.msra.mxu0 %v520
    %527 = vmatprep.subr.mxu0 0.0
    %528 = vmatpush1.xpose.msra.mxu0 %v523
    %529 = vmatprep.subr.mxu0 0.0
    %530 = vmatpush1.xpose.msra.mxu0 0.0
    %531 = vmatprep.subr.mxu0 0.0
    %532 = vmatpush1.xpose.msra.mxu0 0.0
    %533 = vmatprep.subr.mxu0 0.0
    %534 = vmatpush1.xpose.msra.mxu0 0.0
    %535 = vmatprep.subr.mxu0 0.0
    %536 = vmatpush1.xpose.msra.mxu0 0.0
    %537 = vmatprep.subr.mxu0 0.0
    %538 = vmatpush1.xpose.msra.mxu0 0.0
    %539 = vmatprep.subr.mxu0 0.0
    %540 = vmatpush1.xpose.msra.mxu0 0.0
    %541 = vmatprep.subr.mxu0 0.0
    %542 = vmatpush1.xpose.msra.mxu0 0.0
    %543 = vmatprep.subr.mxu0 0.0
    %544 = vmatpush1.xpose.msra.mxu0 0.0
    %545 = vmatprep.subr.mxu0 0.0
    %546 = vmatpush1.xpose.msra.mxu0 0.0
    %547 = vmatprep.subr.mxu0 0.0
    %548 = vmatpush1.xpose.msra.mxu0 0.0
    %549 = vmatprep.subr.mxu0 0.0
    %550 = vmatpush1.xpose.msra.mxu0 0.0
    %551 = vmatprep.subr.mxu0 0.0
    %552 = vmatpush1.xpose.msra.mxu0 0.0
    %553 = vmatprep.subr.mxu0 0.0
    %554 = vmatpush1.xpose.msra.mxu0 0.0
    %555 = vmatprep.subr.mxu0 0.0
    %556 = vmatpush1.xpose.msra.mxu0 0.0
    %557 = vmatprep.subr.mxu0 0.0
    %558 = vmatpush1.xpose.msra.mxu0 0.0
    %559 = vmatprep.subr.mxu0 0.0
    %560 = vmatpush1.xpose.msra.mxu0 0.0
    %561 = vmatprep.subr.mxu0 0.0
    %562 = vmatpush1.xpose.msra.mxu0 0.0
    %563 = vmatprep.subr.mxu0 0.0
    %564 = vmatpush1.xpose.msra.mxu0 0.0
    %565 = vmatprep.subr.mxu0 0.0
    %566 = vmatpush1.xpose.msra.mxu0 0.0
    %567 = vmatprep.subr.mxu0 0.0
    %568 = vmatpush1.xpose.msra.mxu0 0.0
    %569 = vmatprep.subr.mxu0 0.0
    %570 = vmatpush1.xpose.msra.mxu0 0.0
    %571 = vmatprep.subr.mxu0 0.0
    %572 = vmatpush1.xpose.msra.mxu0 0.0
    %573 = vmatprep.subr.mxu0 0.0
    %574 = vmatpush1.xpose.msra.mxu0 0.0
    %575 = vmatprep.subr.mxu0 0.0
    %576 = vmatpush1.xpose.msra.mxu0 0.0
    %577 = vmatprep.subr.mxu0 0.0
    %578 = vmatpush1.xpose.msra.mxu0 0.0
    %579 = vmatprep.subr.mxu0 0.0
    %580 = vmatpush1.xpose.msra.mxu0 0.0
    %581 = vmatprep.subr.mxu0 0.0
    %582 = vmatpush1.xpose.msra.mxu0 0.0
    %583 = vmatprep.subr.mxu0 0.0
    %584 = vmatpush1.xpose.msra.mxu0 0.0
    %585 = vmatprep.subr.mxu0 0.0
    %586 = vmatpush1.xpose.msra.mxu0 0.0
    %587 = vmatprep.subr.mxu0 0.0
    %588 = vmatpush1.xpose.msra.mxu0 0.0
    %589 = vmatprep.mubr.f32.mxu0 0.0
    %590 = vmatmul.mubr.f32.gmra.mrb[0].mxu0 %v514
    %v591 = vpop.f32.mrb[0].mxu0
    %v592 = vadd.f32 %v164, %v591
    %v593 = vpop.f32.mrb[0].mxu0
    %594 = vmatprep.mubr.f32.mxu0 0.0
    %595 = vmatmul.mubr.f32.gmra.mrb[0].mxu0 %v517
    %v596 = vpop.f32.mrb[0].mxu0
    %v597 = vadd.f32 %v165, %v596
    %v598 = vpop.f32.mrb[0].mxu0
    %599 = vdwg.mxu0
    %v600 = vmul.f32 %v592, 1.442695
    %v601 = vpow.pop %v600
    %v602 = vmul.f32 %v597, 1.442695
    %v603 = vpow.pop %v602
    %vm604 = vcmask 130048
    %v605 = vsel %vm604, %v601, 0.0
    %606 = vadd.xlane.f32.xlu0 %v605
    %v607 = vpop.xlane.xlu0 %606
    %v608 = vsel %vm604, %v603, 0.0
    %609 = vadd.xlane.f32.xlu0 %v608
    %v610 = vpop.xlane.xlu0 %609
    %v611 = vadd.f32 %v607, 1e-09
    %v612 = vadd.f32 %v610, 1e-09
    %v613 = vrcp.pop %v611
    %v614 = vrcp.pop %v612
    %v615 = vmul.f32 %v611, %v613
    %v616 = vmul.f32 %v612, %v614
    %v617 = vsub.f32 2.0, %v615
    %v618 = vsub.f32 2.0, %v616
    %v619 = vmul.f32 %v613, %v617
    %v620 = vmul.f32 %v614, %v618
    %v621 = vmul.f32 %v601, %v619
    %v622 = vmul.f32 %v603, %v620
    %v623 = vsel %vm510, %v501, 0.0
    %v624 = vsel %vm510, %v506, 0.0
    %v625 = vsel %vm171, 1, 0
    %vm626 = vcmp.eq.s32.totalorder %v625, 1
    %v627 = vsel %vm626, %v343, 0.0
    %v628 = vsel %vm626, %v348, 0.0
    %v630 = vsel %vm206, %v627, 0
    %v633 = vsel %vm206, %v628, 0
    %635 = vmatprep.subr.mxu0 0.0
    %636 = vmatpush1.xpose.msra.mxu0 %v520
    %637 = vmatprep.subr.mxu0 0.0
    %638 = vmatpush1.xpose.msra.mxu0 %v523
    %639 = vmatprep.subr.mxu0 0.0
    %640 = vmatpush1.xpose.msra.mxu0 0.0
    %641 = vmatprep.subr.mxu0 0.0
    %642 = vmatpush1.xpose.msra.mxu0 0.0
    %643 = vmatprep.subr.mxu0 0.0
    %644 = vmatpush1.xpose.msra.mxu0 0.0
    %645 = vmatprep.subr.mxu0 0.0
    %646 = vmatpush1.xpose.msra.mxu0 0.0
    %647 = vmatprep.subr.mxu0 0.0
    %648 = vmatpush1.xpose.msra.mxu0 0.0
    %649 = vmatprep.subr.mxu0 0.0
    %650 = vmatpush1.xpose.msra.mxu0 0.0
    %651 = vmatprep.subr.mxu0 0.0
    %652 = vmatpush1.xpose.msra.mxu0 0.0
    %653 = vmatprep.subr.mxu0 0.0
    %654 = vmatpush1.xpose.msra.mxu0 0.0
    %655 = vmatprep.subr.mxu0 0.0
    %656 = vmatpush1.xpose.msra.mxu0 0.0
    %657 = vmatprep.subr.mxu0 0.0
    %658 = vmatpush1.xpose.msra.mxu0 0.0
    %659 = vmatprep.subr.mxu0 0.0
    %660 = vmatpush1.xpose.msra.mxu0 0.0
    %661 = vmatprep.subr.mxu0 0.0
    %662 = vmatpush1.xpose.msra.mxu0 0.0
    %663 = vmatprep.subr.mxu0 0.0
    %664 = vmatpush1.xpose.msra.mxu0 0.0
    %665 = vmatprep.subr.mxu0 0.0
    %666 = vmatpush1.xpose.msra.mxu0 0.0
    %667 = vmatprep.subr.mxu0 0.0
    %668 = vmatpush1.xpose.msra.mxu0 0.0
    %669 = vmatprep.subr.mxu0 0.0
    %670 = vmatpush1.xpose.msra.mxu0 0.0
    %671 = vmatprep.subr.mxu0 0.0
    %672 = vmatpush1.xpose.msra.mxu0 0.0
    %673 = vmatprep.subr.mxu0 0.0
    %674 = vmatpush1.xpose.msra.mxu0 0.0
    %675 = vmatprep.subr.mxu0 0.0
    %676 = vmatpush1.xpose.msra.mxu0 0.0
    %677 = vmatprep.subr.mxu0 0.0
    %678 = vmatpush1.xpose.msra.mxu0 0.0
    %679 = vmatprep.subr.mxu0 0.0
    %680 = vmatpush1.xpose.msra.mxu0 0.0
    %681 = vmatprep.subr.mxu0 0.0
    %682 = vmatpush1.xpose.msra.mxu0 0.0
    %683 = vmatprep.subr.mxu0 0.0
    %684 = vmatpush1.xpose.msra.mxu0 0.0
    %685 = vmatprep.subr.mxu0 0.0
    %686 = vmatpush1.xpose.msra.mxu0 0.0
    %687 = vmatprep.subr.mxu0 0.0
    %688 = vmatpush1.xpose.msra.mxu0 0.0
    %689 = vmatprep.subr.mxu0 0.0
    %690 = vmatpush1.xpose.msra.mxu0 0.0
    %691 = vmatprep.subr.mxu0 0.0
    %692 = vmatpush1.xpose.msra.mxu0 0.0
    %693 = vmatprep.subr.mxu0 0.0
    %694 = vmatpush1.xpose.msra.mxu0 0.0
    %695 = vmatprep.subr.mxu0 0.0
    %696 = vmatpush1.xpose.msra.mxu0 0.0
    %697 = vmatprep.subr.mxu0 0.0
    %698 = vmatpush1.xpose.msra.mxu0 0.0
    %699 = vmatprep.mubr.f32.mxu0 0.0
    %700 = vmatmul.mubr.f32.gmra.mrb[0].mxu0 %v630
    %v701 = vpop.f32.mrb[0].mxu0
    %v702 = vadd.f32 %v164, %v701
    %v703 = vpop.f32.mrb[0].mxu0
    %704 = vmatprep.mubr.f32.mxu0 0.0
    %705 = vmatmul.mubr.f32.gmra.mrb[0].mxu0 %v633
    %v706 = vpop.f32.mrb[0].mxu0
    %v707 = vadd.f32 %v165, %v706
    %v708 = vpop.f32.mrb[0].mxu0
    %709 = vdwg.mxu0
    %v710 = vmul.f32 %v702, 1.442695
    %v711 = vpow.pop %v710
    %v712 = vmul.f32 %v707, 1.442695
    %v713 = vpow.pop %v712
    %v714 = vsel %vm604, %v711, 0.0
    %715 = vadd.xlane.f32.xlu0 %v714
    %v716 = vpop.xlane.xlu0 %715
    %v717 = vsel %vm604, %v713, 0.0
    %718 = vadd.xlane.f32.xlu0 %v717
    %v719 = vpop.xlane.xlu0 %718
    %v720 = vadd.f32 %v716, 1e-09
    %v721 = vadd.f32 %v719, 1e-09
    %v722 = vrcp.pop %v720
    %v723 = vrcp.pop %v721
    %v724 = vmul.f32 %v720, %v722
    %v725 = vmul.f32 %v721, %v723
    %v726 = vsub.f32 2.0, %v724
    %v727 = vsub.f32 2.0, %v725
    %v728 = vmul.f32 %v722, %v726
    %v729 = vmul.f32 %v723, %v727
    %v730 = vmul.f32 %v711, %v728
    %v731 = vmul.f32 %v713, %v729
    %v732 = vsel %vm626, %v501, 0.0
    %v733 = vsel %vm626, %v506, 0.0
    %v735 = vsel %vm604, %v730, 0
    %v738 = vsel %vm604, %v731, 0
    %740 = vmatprep.subr.mxu0 0.0
    %741 = vmatpush1.msra.mxu0 %v732
    %742 = vmatprep.subr.mxu0 0.0
    %743 = vmatpush1.msra.mxu0 %v733
    %744 = vmatprep.subr.mxu0 0.0
    %745 = vmatpush1.msra.mxu0 0.0
    %746 = vmatprep.subr.mxu0 0.0
    %747 = vmatpush1.msra.mxu0 0.0
    %748 = vmatprep.subr.mxu0 0.0
    %749 = vmatpush1.msra.mxu0 0.0
    %750 = vmatprep.subr.mxu0 0.0
    %751 = vmatpush1.msra.mxu0 0.0
    %752 = vmatprep.subr.mxu0 0.0
    %753 = vmatpush1.msra.mxu0 0.0
    %754 = vmatprep.subr.mxu0 0.0
    %755 = vmatpush1.msra.mxu0 0.0
    %756 = vmatprep.subr.mxu0 0.0
    %757 = vmatpush1.msra.mxu0 0.0
    %758 = vmatprep.subr.mxu0 0.0
    %759 = vmatpush1.msra.mxu0 0.0
    %760 = vmatprep.subr.mxu0 0.0
    %761 = vmatpush1.msra.mxu0 0.0
    %762 = vmatprep.subr.mxu0 0.0
    %763 = vmatpush1.msra.mxu0 0.0
    %764 = vmatprep.subr.mxu0 0.0
    %765 = vmatpush1.msra.mxu0 0.0
    %766 = vmatprep.subr.mxu0 0.0
    %767 = vmatpush1.msra.mxu0 0.0
    %768 = vmatprep.subr.mxu0 0.0
    %769 = vmatpush1.msra.mxu0 0.0
    %770 = vmatprep.subr.mxu0 0.0
    %771 = vmatpush1.msra.mxu0 0.0
    %772 = vmatprep.subr.mxu0 0.0
    %773 = vmatpush1.msra.mxu0 0.0
    %774 = vmatprep.subr.mxu0 0.0
    %775 = vmatpush1.msra.mxu0 0.0
    %776 = vmatprep.subr.mxu0 0.0
    %777 = vmatpush1.msra.mxu0 0.0
    %778 = vmatprep.subr.mxu0 0.0
    %779 = vmatpush1.msra.mxu0 0.0
    %780 = vmatprep.subr.mxu0 0.0
    %781 = vmatpush1.msra.mxu0 0.0
    %782 = vmatprep.subr.mxu0 0.0
    %783 = vmatpush1.msra.mxu0 0.0
    %784 = vmatprep.subr.mxu0 0.0
    %785 = vmatpush1.msra.mxu0 0.0
    %786 = vmatprep.subr.mxu0 0.0
    %787 = vmatpush1.msra.mxu0 0.0
    %788 = vmatprep.subr.mxu0 0.0
    %789 = vmatpush1.msra.mxu0 0.0
    %790 = vmatprep.subr.mxu0 0.0
    %791 = vmatpush1.msra.mxu0 0.0
    %792 = vmatprep.subr.mxu0 0.0
    %793 = vmatpush1.msra.mxu0 0.0
    %794 = vmatprep.subr.mxu0 0.0
    %795 = vmatpush1.msra.mxu0 0.0
    %796 = vmatprep.subr.mxu0 0.0
    %797 = vmatpush1.msra.mxu0 0.0
    %798 = vmatprep.subr.mxu0 0.0
    %799 = vmatpush1.msra.mxu0 0.0
    %800 = vmatprep.subr.mxu0 0.0
    %801 = vmatpush1.msra.mxu0 0.0
    %802 = vmatprep.subr.mxu0 0.0
    %803 = vmatpush1.msra.mxu0 0.0
    %804 = vmatprep.mubr.f32.mxu0 0.0
    %805 = vmatmul.mubr.f32.gmra.mrb[0].mxu0 %v735
    %v806 = vpop.f32.mrb[0].mxu0
    %v807 = vadd.f32 0.0, %v806
    %v808 = vpop.f32.mrb[0].mxu0
    %809 = vmatprep.mubr.f32.mxu0 0.0
    %810 = vmatmul.mubr.f32.gmra.mrb[0].mxu0 %v738
    %v811 = vpop.f32.mrb[0].mxu0
    %v812 = vadd.f32 0.0, %v811
    %v813 = vpop.f32.mrb[0].mxu0
    %814 = vdwg.mxu0
    %v816 = vsel %vm604, %v621, 0
    %v819 = vsel %vm604, %v622, 0
    %821 = vmatprep.subr.mxu0 0.0
    %822 = vmatpush1.msra.mxu0 %v623
    %823 = vmatprep.subr.mxu0 0.0
    %824 = vmatpush1.msra.mxu0 %v624
    %825 = vmatprep.subr.mxu0 0.0
    %826 = vmatpush1.msra.mxu0 0.0
    %827 = vmatprep.subr.mxu0 0.0
    %828 = vmatpush1.msra.mxu0 0.0
    %829 = vmatprep.subr.mxu0 0.0
    %830 = vmatpush1.msra.mxu0 0.0
    %831 = vmatprep.subr.mxu0 0.0
    %832 = vmatpush1.msra.mxu0 0.0
    %833 = vmatprep.subr.mxu0 0.0
    %834 = vmatpush1.msra.mxu0 0.0
    %835 = vmatprep.subr.mxu0 0.0
    %836 = vmatpush1.msra.mxu0 0.0
    %837 = vmatprep.subr.mxu0 0.0
    %838 = vmatpush1.msra.mxu0 0.0
    %839 = vmatprep.subr.mxu0 0.0
    %840 = vmatpush1.msra.mxu0 0.0
    %841 = vmatprep.subr.mxu0 0.0
    %842 = vmatpush1.msra.mxu0 0.0
    %843 = vmatprep.subr.mxu0 0.0
    %844 = vmatpush1.msra.mxu0 0.0
    %845 = vmatprep.subr.mxu0 0.0
    %846 = vmatpush1.msra.mxu0 0.0
    %847 = vmatprep.subr.mxu0 0.0
    %848 = vmatpush1.msra.mxu0 0.0
    %849 = vmatprep.subr.mxu0 0.0
    %850 = vmatpush1.msra.mxu0 0.0
    %851 = vmatprep.subr.mxu0 0.0
    %852 = vmatpush1.msra.mxu0 0.0
    %853 = vmatprep.subr.mxu0 0.0
    %854 = vmatpush1.msra.mxu0 0.0
    %855 = vmatprep.subr.mxu0 0.0
    %856 = vmatpush1.msra.mxu0 0.0
    %857 = vmatprep.subr.mxu0 0.0
    %858 = vmatpush1.msra.mxu0 0.0
    %859 = vmatprep.subr.mxu0 0.0
    %860 = vmatpush1.msra.mxu0 0.0
    %861 = vmatprep.subr.mxu0 0.0
    %862 = vmatpush1.msra.mxu0 0.0
    %863 = vmatprep.subr.mxu0 0.0
    %864 = vmatpush1.msra.mxu0 0.0
    %865 = vmatprep.subr.mxu0 0.0
    %866 = vmatpush1.msra.mxu0 0.0
    %867 = vmatprep.subr.mxu0 0.0
    %868 = vmatpush1.msra.mxu0 0.0
    %869 = vmatprep.subr.mxu0 0.0
    %870 = vmatpush1.msra.mxu0 0.0
    %871 = vmatprep.subr.mxu0 0.0
    %872 = vmatpush1.msra.mxu0 0.0
    %873 = vmatprep.subr.mxu0 0.0
    %874 = vmatpush1.msra.mxu0 0.0
    %875 = vmatprep.subr.mxu0 0.0
    %876 = vmatpush1.msra.mxu0 0.0
    %877 = vmatprep.subr.mxu0 0.0
    %878 = vmatpush1.msra.mxu0 0.0
    %879 = vmatprep.subr.mxu0 0.0
    %880 = vmatpush1.msra.mxu0 0.0
    %881 = vmatprep.subr.mxu0 0.0
    %882 = vmatpush1.msra.mxu0 0.0
    %883 = vmatprep.subr.mxu0 0.0
    %884 = vmatpush1.msra.mxu0 0.0
    %885 = vmatprep.mubr.f32.mxu0 0.0
    %886 = vmatmul.mubr.f32.gmra.mrb[0].mxu0 %v816
    %v887 = vpop.f32.mrb[0].mxu0
    %v888 = vadd.f32 %v807, %v887
    %v889 = vpop.f32.mrb[0].mxu0
    %890 = vmatprep.mubr.f32.mxu0 0.0
    %891 = vmatmul.mubr.f32.gmra.mrb[0].mxu0 %v819
    %v892 = vpop.f32.mrb[0].mxu0
    %v893 = vadd.f32 %v812, %v892
    %v894 = vpop.f32.mrb[0].mxu0
    %895 = vdwg.mxu0
    %v897 = vsel %vm206, %v888, 0
    %v900 = vsel %vm206, %v893, 0
    %902 = vmatprep.subr.mxu0 0.0
    %903 = vmatpush1.msra.mxu0 %v184
    %904 = vmatprep.subr.mxu0 0.0
    %905 = vmatpush1.msra.mxu0 %v185
    %906 = vmatprep.subr.mxu0 0.0
    %907 = vmatpush1.msra.mxu0 %v186
    %908 = vmatprep.subr.mxu0 0.0
    %909 = vmatpush1.msra.mxu0 %v187
    %910 = vmatprep.subr.mxu0 0.0
    %911 = vmatpush1.msra.mxu0 0.0
    %912 = vmatprep.subr.mxu0 0.0
    %913 = vmatpush1.msra.mxu0 0.0
    %914 = vmatprep.subr.mxu0 0.0
    %915 = vmatpush1.msra.mxu0 0.0
    %916 = vmatprep.subr.mxu0 0.0
    %917 = vmatpush1.msra.mxu0 0.0
    %918 = vmatprep.subr.mxu0 0.0
    %919 = vmatpush1.msra.mxu0 0.0
    %920 = vmatprep.subr.mxu0 0.0
    %921 = vmatpush1.msra.mxu0 0.0
    %922 = vmatprep.subr.mxu0 0.0
    %923 = vmatpush1.msra.mxu0 0.0
    %924 = vmatprep.subr.mxu0 0.0
    %925 = vmatpush1.msra.mxu0 0.0
    %926 = vmatprep.subr.mxu0 0.0
    %927 = vmatpush1.msra.mxu0 0.0
    %928 = vmatprep.subr.mxu0 0.0
    %929 = vmatpush1.msra.mxu0 0.0
    %930 = vmatprep.subr.mxu0 0.0
    %931 = vmatpush1.msra.mxu0 0.0
    %932 = vmatprep.subr.mxu0 0.0
    %933 = vmatpush1.msra.mxu0 0.0
    %934 = vmatprep.subr.mxu0 0.0
    %935 = vmatpush1.msra.mxu0 0.0
    %936 = vmatprep.subr.mxu0 0.0
    %937 = vmatpush1.msra.mxu0 0.0
    %938 = vmatprep.subr.mxu0 0.0
    %939 = vmatpush1.msra.mxu0 0.0
    %940 = vmatprep.subr.mxu0 0.0
    %941 = vmatpush1.msra.mxu0 0.0
    %942 = vmatprep.subr.mxu0 0.0
    %943 = vmatpush1.msra.mxu0 0.0
    %944 = vmatprep.subr.mxu0 0.0
    %945 = vmatpush1.msra.mxu0 0.0
    %946 = vmatprep.subr.mxu0 0.0
    %947 = vmatpush1.msra.mxu0 0.0
    %948 = vmatprep.subr.mxu0 0.0
    %949 = vmatpush1.msra.mxu0 0.0
    %950 = vmatprep.subr.mxu0 0.0
    %951 = vmatpush1.msra.mxu0 0.0
    %952 = vmatprep.subr.mxu0 0.0
    %953 = vmatpush1.msra.mxu0 0.0
    %954 = vmatprep.subr.mxu0 0.0
    %955 = vmatpush1.msra.mxu0 0.0
    %956 = vmatprep.subr.mxu0 0.0
    %957 = vmatpush1.msra.mxu0 0.0
    %958 = vmatprep.subr.mxu0 0.0
    %959 = vmatpush1.msra.mxu0 0.0
    %960 = vmatprep.subr.mxu0 0.0
    %961 = vmatpush1.msra.mxu0 0.0
    %962 = vmatprep.subr.mxu0 0.0
    %963 = vmatpush1.msra.mxu0 0.0
    %964 = vmatprep.subr.mxu0 0.0
    %965 = vmatpush1.msra.mxu0 0.0
    %966 = vmatprep.mubr.f32.mxu0 0.0
    %967 = vmatmul.mubr.f32.gmra.mrb[0].mxu0 %v897
    %v968 = vpop.f32.mrb[0].mxu0
    %v969 = vadd.f32 0.0, %v968
    %v970 = vpop.f32.mrb[0].mxu0
    %971 = vmatprep.mubr.f32.mxu0 0.0
    %972 = vmatmul.mubr.f32.gmra.mrb[0].mxu0 %v900
    %v973 = vpop.f32.mrb[0].mxu0
    %v974 = vadd.f32 0.0, %v973
    %v975 = vpop.f32.mrb[0].mxu0
    %976 = vdwg.mxu0
    %v977 = vadd.f32 %v143, %v969
    %v978 = vadd.f32 %v148, %v974
    %v979 = vlaneseq
    %v980 = vshrl.u32 %v979, 7
    %v981 = vsub.s32 0, %v980
    %v982 = vrot.slane %v200, %v981
    %v983 = vadd.f32 %v977, %v982
    %v984 = vadd.f32 %v978, %v982
    %v985 = vsel %vm206, %v983, 0.0
    %986 = vadd.xlane.f32.xlu0 %v985
    %v987 = vpop.xlane.xlu0 %986
    %v988 = vsel %vm206, %v984, 0.0
    %989 = vadd.xlane.f32.xlu0 %v988
    %v990 = vpop.xlane.xlu0 %989
    %v991 = vmul.f32 %v987, %v213
    %v992 = vmul.f32 %v990, %v213
    %v993 = vsub.f32 %v983, %v991
    %v994 = vsub.f32 %v984, %v992
    %v995 = vmul.f32 %v993, %v993
    %v996 = vmul.f32 %v994, %v994
    %v997 = vsel %vm206, %v995, 0.0
    %998 = vadd.xlane.f32.xlu0 %v997
    %v999 = vpop.xlane.xlu0 %998
    %v1000 = vsel %vm206, %v996, 0.0
    %1001 = vadd.xlane.f32.xlu0 %v1000
    %v1002 = vpop.xlane.xlu0 %1001
    %v1003 = vmul.f32 %v999, 0.032258064
    %v1004 = vmul.f32 %v1002, 0.032258064
    %v1005 = vlaneseq
    %v1006 = vshrl.u32 %v1005, 7
    %v1007 = vsub.s32 0, %v1006
    %v1008 = vrot.slane %v204, %v1007
    %v1009 = vmul.f32 %v1008, %v993
    %v1010 = vmul.f32 %v1008, %v994
    %v1011 = vrsqrt.pop %v1003
    %v1012 = vmul.f32 %v1003, %v1011
    %vm1013 = vcmp.eq.f32.partialorder %v1003, inf
    %v1014 = vsel %vm1013, %v1003, %v1012
    %vm1015 = vcmp.eq.f32.partialorder %v1003, 0.0
    %v1016 = vand.u32 %v1003, 2147483648
    %v1017 = vsel %vm1015, %v1016, %v1014
    %v1018 = vrsqrt.pop %v1004
    %v1019 = vmul.f32 %v1004, %v1018
    %vm1020 = vcmp.eq.f32.partialorder %v1004, inf
    %v1021 = vsel %vm1020, %v1004, %v1019
    %vm1022 = vcmp.eq.f32.partialorder %v1004, 0.0
    %v1023 = vand.u32 %v1004, 2147483648
    %v1024 = vsel %vm1022, %v1023, %v1021
    %v1025 = vadd.f32 %v1017, 1e-06
    %v1026 = vadd.f32 %v1024, 1e-06
    %v1027 = vrcp.pop %v1025
    %v1028 = vrcp.pop %v1026
    %v1029 = vmul.f32 %v1025, %v1027
    %v1030 = vmul.f32 %v1026, %v1028
    %v1031 = vsub.f32 2.0, %v1029
    %v1032 = vsub.f32 2.0, %v1030
    %v1033 = vmul.f32 %v1027, %v1031
    %v1034 = vmul.f32 %v1028, %v1032
    %v1035 = vmul.f32 %v1009, %v1033
    %v1036 = vmul.f32 %v1010, %v1034
    %v1037 = vlaneseq
    %v1038 = vshrl.u32 %v1037, 7
    %v1039 = vsub.s32 0, %v1038
    %v1040 = vrot.slane %v205, %v1039
    %v1041 = vadd.f32 %v1035, %v1040
    %v1042 = vadd.f32 %v1036, %v1040
    %v1043 = vlaneseq
    %v1044 = vshrl.u32 %v1043, 7
    %v1045 = vsub.s32 0, %v1044
    %v1046 = vrot.slane %v196, %v1045
    %v1048 = vsel %vm206, %v1041, 0
    %v1051 = vsel %vm206, %v1042, 0
    %1053 = vmatprep.subr.mxu0 0.0
    %1054 = vmatpush1.msra.mxu0 %v188
    %1055 = vmatprep.subr.mxu0 0.0
    %1056 = vmatpush1.msra.mxu0 %v189
    %1057 = vmatprep.subr.mxu0 0.0
    %1058 = vmatpush1.msra.mxu0 %v190
    %1059 = vmatprep.subr.mxu0 0.0
    %1060 = vmatpush1.msra.mxu0 %v191
    %1061 = vmatprep.subr.mxu0 0.0
    %1062 = vmatpush1.msra.mxu0 0.0
    %1063 = vmatprep.subr.mxu0 0.0
    %1064 = vmatpush1.msra.mxu0 0.0
    %1065 = vmatprep.subr.mxu0 0.0
    %1066 = vmatpush1.msra.mxu0 0.0
    %1067 = vmatprep.subr.mxu0 0.0
    %1068 = vmatpush1.msra.mxu0 0.0
    %1069 = vmatprep.subr.mxu0 0.0
    %1070 = vmatpush1.msra.mxu0 0.0
    %1071 = vmatprep.subr.mxu0 0.0
    %1072 = vmatpush1.msra.mxu0 0.0
    %1073 = vmatprep.subr.mxu0 0.0
    %1074 = vmatpush1.msra.mxu0 0.0
    %1075 = vmatprep.subr.mxu0 0.0
    %1076 = vmatpush1.msra.mxu0 0.0
    %1077 = vmatprep.subr.mxu0 0.0
    %1078 = vmatpush1.msra.mxu0 0.0
    %1079 = vmatprep.subr.mxu0 0.0
    %1080 = vmatpush1.msra.mxu0 0.0
    %1081 = vmatprep.subr.mxu0 0.0
    %1082 = vmatpush1.msra.mxu0 0.0
    %1083 = vmatprep.subr.mxu0 0.0
    %1084 = vmatpush1.msra.mxu0 0.0
    %1085 = vmatprep.subr.mxu0 0.0
    %1086 = vmatpush1.msra.mxu0 0.0
    %1087 = vmatprep.subr.mxu0 0.0
    %1088 = vmatpush1.msra.mxu0 0.0
    %1089 = vmatprep.subr.mxu0 0.0
    %1090 = vmatpush1.msra.mxu0 0.0
    %1091 = vmatprep.subr.mxu0 0.0
    %1092 = vmatpush1.msra.mxu0 0.0
    %1093 = vmatprep.subr.mxu0 0.0
    %1094 = vmatpush1.msra.mxu0 0.0
    %1095 = vmatprep.subr.mxu0 0.0
    %1096 = vmatpush1.msra.mxu0 0.0
    %1097 = vmatprep.subr.mxu0 0.0
    %1098 = vmatpush1.msra.mxu0 0.0
    %1099 = vmatprep.subr.mxu0 0.0
    %1100 = vmatpush1.msra.mxu0 0.0
    %1101 = vmatprep.subr.mxu0 0.0
    %1102 = vmatpush1.msra.mxu0 0.0
    %1103 = vmatprep.subr.mxu0 0.0
    %1104 = vmatpush1.msra.mxu0 0.0
    %1105 = vmatprep.subr.mxu0 0.0
    %1106 = vmatpush1.msra.mxu0 0.0
    %1107 = vmatprep.subr.mxu0 0.0
    %1108 = vmatpush1.msra.mxu0 0.0
    %1109 = vmatprep.subr.mxu0 0.0
    %1110 = vmatpush1.msra.mxu0 0.0
    %1111 = vmatprep.subr.mxu0 0.0
    %1112 = vmatpush1.msra.mxu0 0.0
    %1113 = vmatprep.subr.mxu0 0.0
    %1114 = vmatpush1.msra.mxu0 0.0
    %1115 = vmatprep.subr.mxu0 0.0
    %1116 = vmatpush1.msra.mxu0 0.0
    %1117 = vmatprep.mubr.f32.mxu0 0.0
    %1118 = vmatmul.mubr.f32.gmra.mrb[0].mxu0 %v1048
    %v1119 = vpop.f32.mrb[0].mxu0
    %v1120 = vadd.f32 %v1046, %v1119
    %v1121 = vpop.f32.mrb[0].mxu0
    %1122 = vmatprep.mubr.f32.mxu0 0.0
    %1123 = vmatmul.mubr.f32.gmra.mrb[0].mxu0 %v1051
    %v1124 = vpop.f32.mrb[0].mxu0
    %v1125 = vadd.f32 %v1046, %v1124
    %v1126 = vpop.f32.mrb[0].mxu0
    %1127 = vdwg.mxu0
    %v1128 = vmul.f32 %v1120, 0.5
    %v1129 = vmul.f32 %v1125, 0.5
    %v1130 = vmul.f32 %v1120, 0.044715
    %v1131 = vmul.f32 %v1125, 0.044715
    %v1132 = vmul.f32 %v1130, %v1120
    %v1133 = vmul.f32 %v1131, %v1125
    %v1134 = vmul.f32 %v1132, %v1120
    %v1135 = vmul.f32 %v1133, %v1125
    %v1136 = vadd.f32 %v1120, %v1134
    %v1137 = vadd.f32 %v1125, %v1135
    %v1138 = vmul.f32 %v1136, 0.7978846
    %v1139 = vmul.f32 %v1137, 0.7978846
    %v1140 = vtanh.pop %v1138
    %v1141 = vtanh.pop %v1139
    %v1142 = vadd.f32 %v1140, 1.0
    %v1143 = vadd.f32 %v1141, 1.0
    %v1144 = vmul.f32 %v1128, %v1142
    %v1145 = vmul.f32 %v1129, %v1143
    %1146 = vmatprep.subr.mxu0 0.0
    %1147 = vmatpush1.xpose.msra.mxu0 %v192
    %1148 = vmatprep.subr.mxu0 0.0
    %1149 = vmatpush1.xpose.msra.mxu0 %v193
    %1150 = vmatprep.subr.mxu0 0.0
    %1151 = vmatpush1.xpose.msra.mxu0 %v194
    %1152 = vmatprep.subr.mxu0 0.0
    %1153 = vmatpush1.xpose.msra.mxu0 %v195
    %1154 = vmatprep.subr.mxu0 0.0
    %1155 = vmatpush1.xpose.msra.mxu0 0.0
    %1156 = vmatprep.subr.mxu0 0.0
    %1157 = vmatpush1.xpose.msra.mxu0 0.0
    %1158 = vmatprep.subr.mxu0 0.0
    %1159 = vmatpush1.xpose.msra.mxu0 0.0
    %1160 = vmatprep.subr.mxu0 0.0
    %1161 = vmatpush1.xpose.msra.mxu0 0.0
    %1162 = vmatprep.subr.mxu0 0.0
    %1163 = vmatpush1.xpose.msra.mxu0 0.0
    %1164 = vmatprep.subr.mxu0 0.0
    %1165 = vmatpush1.xpose.msra.mxu0 0.0
    %1166 = vmatprep.subr.mxu0 0.0
    %1167 = vmatpush1.xpose.msra.mxu0 0.0
    %1168 = vmatprep.subr.mxu0 0.0
    %1169 = vmatpush1.xpose.msra.mxu0 0.0
    %1170 = vmatprep.subr.mxu0 0.0
    %1171 = vmatpush1.xpose.msra.mxu0 0.0
    %1172 = vmatprep.subr.mxu0 0.0
    %1173 = vmatpush1.xpose.msra.mxu0 0.0
    %1174 = vmatprep.subr.mxu0 0.0
    %1175 = vmatpush1.xpose.msra.mxu0 0.0
    %1176 = vmatprep.subr.mxu0 0.0
    %1177 = vmatpush1.xpose.msra.mxu0 0.0
    %1178 = vmatprep.subr.mxu0 0.0
    %1179 = vmatpush1.xpose.msra.mxu0 0.0
    %1180 = vmatprep.subr.mxu0 0.0
    %1181 = vmatpush1.xpose.msra.mxu0 0.0
    %1182 = vmatprep.subr.mxu0 0.0
    %1183 = vmatpush1.xpose.msra.mxu0 0.0
    %1184 = vmatprep.subr.mxu0 0.0
    %1185 = vmatpush1.xpose.msra.mxu0 0.0
    %1186 = vmatprep.subr.mxu0 0.0
    %1187 = vmatpush1.xpose.msra.mxu0 0.0
    %1188 = vmatprep.subr.mxu0 0.0
    %1189 = vmatpush1.xpose.msra.mxu0 0.0
    %1190 = vmatprep.subr.mxu0 0.0
    %1191 = vmatpush1.xpose.msra.mxu0 0.0
    %1192 = vmatprep.subr.mxu0 0.0
    %1193 = vmatpush1.xpose.msra.mxu0 0.0
    %1194 = vmatprep.subr.mxu0 0.0
    %1195 = vmatpush1.xpose.msra.mxu0 0.0
    %1196 = vmatprep.subr.mxu0 0.0
    %1197 = vmatpush1.xpose.msra.mxu0 0.0
    %1198 = vmatprep.subr.mxu0 0.0
    %1199 = vmatpush1.xpose.msra.mxu0 0.0
    %1200 = vmatprep.subr.mxu0 0.0
    %1201 = vmatpush1.xpose.msra.mxu0 0.0
    %1202 = vmatprep.subr.mxu0 0.0
    %1203 = vmatpush1.xpose.msra.mxu0 0.0
    %1204 = vmatprep.subr.mxu0 0.0
    %1205 = vmatpush1.xpose.msra.mxu0 0.0
    %1206 = vmatprep.subr.mxu0 0.0
    %1207 = vmatpush1.xpose.msra.mxu0 0.0
    %1208 = vmatprep.subr.mxu0 0.0
    %1209 = vmatpush1.xpose.msra.mxu0 0.0
    %1210 = vmatprep.mubr.f32.mxu0 0.0
    %1211 = vmatmul.mubr.f32.gmra.mrb[0].mxu0 %v1144
    %v1212 = vpop.f32.mrb[0].mxu0
    %v1213 = vadd.f32 0.0, %v1212
    %v1214 = vpop.f32.mrb[0].mxu0
    %1215 = vmatprep.mubr.f32.mxu0 0.0
    %1216 = vmatmul.mubr.f32.gmra.mrb[0].mxu0 %v1145
    %v1217 = vpop.f32.mrb[0].mxu0
    %v1218 = vadd.f32 0.0, %v1217
    %v1219 = vpop.f32.mrb[0].mxu0
    %1220 = vdwg.mxu0
    %v1221 = vadd.f32 %v983, %v1213
    %v1222 = vadd.f32 %v984, %v1218
    %v1223 = vlaneseq
    %v1224 = vshrl.u32 %v1223, 7
    %v1225 = vsub.s32 0, %v1224
    %v1226 = vrot.slane %v203, %v1225
    %v1227 = vadd.f32 %v1221, %v1226
    %v1228 = vadd.f32 %v1222, %v1226
    %v1229 = vld [vmem:[%s3 + $0x80] sm:$0xff]
    %v1230 = vld [vmem:[%s3 + $0x88] sm:$0xff]
    %v1231 = vld [vmem:[%s3 + $0x90] sm:$0xff]
    %v1232 = vld [vmem:[%s3 + $0x98] sm:$0xff]
    %v1233 = vld [vmem:[%s3 + $0xa0] sm:$0xff]
    %v1234 = vld [vmem:[%s3 + $0xa8] sm:$0xff]
    %v1235 = vld [vmem:[%s3 + $0xb0] sm:$0xff]
    %v1236 = vld [vmem:[%s3 + $0xb8] sm:$0xff]
    %v1237 = vld [vmem:[%s3 + $0xc0] sm:$0xff]
    %v1238 = vld [vmem:[%s3 + $0xc8] sm:$0xff]
    %v1239 = vld [vmem:[%s3 + $0xd0] sm:$0xff]
    %v1240 = vld [vmem:[%s3 + $0xd8] sm:$0xff]
    %v1241 = vld [vmem:[%s3 + $0xe0] sm:$0xff]
    %v1242 = vld [vmem:[%s3 + $0xe8] sm:$0xff]
    %v1243 = vld [vmem:[%s3 + $0xf0] sm:$0xff]
    %v1244 = vld [vmem:[%s3 + $0xf8] sm:$0xff]
    %v1245 = vld [vmem:[%s4 + $0x40] sm:$0xff]
    %v1246 = vld [vmem:[%s4 + $0x48] sm:$0xff]
    %v1247 = vld [vmem:[%s4 + $0x50] sm:$0xff]
    %v1248 = vld [vmem:[%s4 + $0x58] sm:$0xff]
    %v1249 = vld [vmem:[%s4 + $0x60] sm:$0xff]
    %v1250 = vld [vmem:[%s4 + $0x68] sm:$0xff]
    %v1251 = vld [vmem:[%s4 + $0x70] sm:$0xff]
    %v1252 = vld [vmem:[%s4 + $0x78] sm:$0xff]
    %v1253 = vld [vmem:[%s6 + $0x1] sm:$0x1]
    %v1254 = vld [vmem:[%s5 + $0x9] sm:$0x1]
    %v1255 = vld [vmem:[%s5 + $0xa] sm:$0x1]
    %v1256 = vld [vmem:[%s5 + $0xb] sm:$0x1]
    %v1257 = vld [vmem:[%s5 + $0xc] sm:$0x1]
    %v1258 = vld [vmem:[%s5 + $0xd] sm:$0x1]
    %v1259 = vld [vmem:[%s5 + $0xe] sm:$0x1]
    %v1260 = vld [vmem:[%s5 + $0xf] sm:$0x1]
    %v1261 = vld [vmem:[%s5 + $0x10] sm:$0x1]
    %v1262 = vld [vmem:[%s5 + $0x11] sm:$0x1]
    %v1263 = vsel %vm206, %v1227, 0.0
    %1264 = vadd.xlane.f32.xlu0 %v1263
    %v1265 = vpop.xlane.xlu0 %1264
    %v1266 = vsel %vm206, %v1228, 0.0
    %1267 = vadd.xlane.f32.xlu0 %v1266
    %v1268 = vpop.xlane.xlu0 %1267
    %v1269 = vmul.f32 %v1265, %v213
    %v1270 = vmul.f32 %v1268, %v213
    %v1271 = vsub.f32 %v1227, %v1269
    %v1272 = vsub.f32 %v1228, %v1270
    %v1273 = vmul.f32 %v1271, %v1271
    %v1274 = vmul.f32 %v1272, %v1272
    %v1275 = vsel %vm206, %v1273, 0.0
    %1276 = vadd.xlane.f32.xlu0 %v1275
    %v1277 = vpop.xlane.xlu0 %1276
    %v1278 = vsel %vm206, %v1274, 0.0
    %1279 = vadd.xlane.f32.xlu0 %v1278
    %v1280 = vpop.xlane.xlu0 %1279
    %v1281 = vmul.f32 %v1277, 0.032258064
    %v1282 = vmul.f32 %v1280, 0.032258064
    %v1283 = vlaneseq
    %v1284 = vshrl.u32 %v1283, 7
    %v1285 = vsub.s32 0, %v1284
    %v1286 = vrot.slane %v1258, %v1285
    %v1287 = vmul.f32 %v1286, %v1271
    %v1288 = vmul.f32 %v1286, %v1272
    %v1289 = vrsqrt.pop %v1281
    %v1290 = vmul.f32 %v1281, %v1289
    %vm1291 = vcmp.eq.f32.partialorder %v1281, inf
    %v1292 = vsel %vm1291, %v1281, %v1290
    %vm1293 = vcmp.eq.f32.partialorder %v1281, 0.0
    %v1294 = vand.u32 %v1281, 2147483648
    %v1295 = vsel %vm1293, %v1294, %v1292
    %v1296 = vrsqrt.pop %v1282
    %v1297 = vmul.f32 %v1282, %v1296
    %vm1298 = vcmp.eq.f32.partialorder %v1282, inf
    %v1299 = vsel %vm1298, %v1282, %v1297
    %vm1300 = vcmp.eq.f32.partialorder %v1282, 0.0
    %v1301 = vand.u32 %v1282, 2147483648
    %v1302 = vsel %vm1300, %v1301, %v1299
    %v1303 = vadd.f32 %v1295, 1e-06
    %v1304 = vadd.f32 %v1302, 1e-06
    %v1305 = vrcp.pop %v1303
    %v1306 = vrcp.pop %v1304
    %v1307 = vmul.f32 %v1303, %v1305
    %v1308 = vmul.f32 %v1304, %v1306
    %v1309 = vsub.f32 2.0, %v1307
    %v1310 = vsub.f32 2.0, %v1308
    %v1311 = vmul.f32 %v1305, %v1309
    %v1312 = vmul.f32 %v1306, %v1310
    %v1313 = vmul.f32 %v1287, %v1311
    %v1314 = vmul.f32 %v1288, %v1312
    %v1315 = vlaneseq
    %v1316 = vshrl.u32 %v1315, 7
    %v1317 = vsub.s32 0, %v1316
    %v1318 = vrot.slane %v1259, %v1317
    %v1319 = vadd.f32 %v1313, %v1318
    %v1320 = vadd.f32 %v1314, %v1318
    %v1321 = vlaneseq
    %v1322 = vshrl.u32 %v1321, 7
    %v1323 = vsub.s32 0, %v1322
    %v1324 = vrot.slane %v1254, %v1323
    %v1326 = vsel %vm206, %v1319, 0
    %v1329 = vsel %vm206, %v1320, 0
    %1331 = vmatprep.subr.mxu0 0.0
    %1332 = vmatpush1.msra.mxu0 %v1229
    %1333 = vmatprep.subr.mxu0 0.0
    %1334 = vmatpush1.msra.mxu0 %v1230
    %1335 = vmatprep.subr.mxu0 0.0
    %1336 = vmatpush1.msra.mxu0 %v1231
    %1337 = vmatprep.subr.mxu0 0.0
    %1338 = vmatpush1.msra.mxu0 %v1232
    %1339 = vmatprep.subr.mxu0 0.0
    %1340 = vmatpush1.msra.mxu0 0.0
    %1341 = vmatprep.subr.mxu0 0.0
    %1342 = vmatpush1.msra.mxu0 0.0
    %1343 = vmatprep.subr.mxu0 0.0
    %1344 = vmatpush1.msra.mxu0 0.0
    %1345 = vmatprep.subr.mxu0 0.0
    %1346 = vmatpush1.msra.mxu0 0.0
    %1347 = vmatprep.subr.mxu0 0.0
    %1348 = vmatpush1.msra.mxu0 0.0
    %1349 = vmatprep.subr.mxu0 0.0
    %1350 = vmatpush1.msra.mxu0 0.0
    %1351 = vmatprep.subr.mxu0 0.0
    %1352 = vmatpush1.msra.mxu0 0.0
    %1353 = vmatprep.subr.mxu0 0.0
    %1354 = vmatpush1.msra.mxu0 0.0
    %1355 = vmatprep.subr.mxu0 0.0
    %1356 = vmatpush1.msra.mxu0 0.0
    %1357 = vmatprep.subr.mxu0 0.0
    %1358 = vmatpush1.msra.mxu0 0.0
    %1359 = vmatprep.subr.mxu0 0.0
    %1360 = vmatpush1.msra.mxu0 0.0
    %1361 = vmatprep.subr.mxu0 0.0
    %1362 = vmatpush1.msra.mxu0 0.0
    %1363 = vmatprep.subr.mxu0 0.0
    %1364 = vmatpush1.msra.mxu0 0.0
    %1365 = vmatprep.subr.mxu0 0.0
    %1366 = vmatpush1.msra.mxu0 0.0
    %1367 = vmatprep.subr.mxu0 0.0
    %1368 = vmatpush1.msra.mxu0 0.0
    %1369 = vmatprep.subr.mxu0 0.0
    %1370 = vmatpush1.msra.mxu0 0.0
    %1371 = vmatprep.subr.mxu0 0.0
    %1372 = vmatpush1.msra.mxu0 0.0
    %1373 = vmatprep.subr.mxu0 0.0
    %1374 = vmatpush1.msra.mxu0 0.0
    %1375 = vmatprep.subr.mxu0 0.0
    %1376 = vmatpush1.msra.mxu0 0.0
    %1377 = vmatprep.subr.mxu0 0.0
    %1378 = vmatpush1.msra.mxu0 0.0
    %1379 = vmatprep.subr.mxu0 0.0
    %1380 = vmatpush1.msra.mxu0 0.0
    %1381 = vmatprep.subr.mxu0 0.0
    %1382 = vmatpush1.msra.mxu0 0.0
    %1383 = vmatprep.subr.mxu0 0.0
    %1384 = vmatpush1.msra.mxu0 0.0
    %1385 = vmatprep.subr.mxu0 0.0
    %1386 = vmatpush1.msra.mxu0 0.0
    %1387 = vmatprep.subr.mxu0 0.0
    %1388 = vmatpush1.msra.mxu0 0.0
    %1389 = vmatprep.subr.mxu0 0.0
    %1390 = vmatpush1.msra.mxu0 0.0
    %1391 = vmatprep.subr.mxu0 0.0
    %1392 = vmatpush1.msra.mxu0 0.0
    %1393 = vmatprep.subr.mxu0 0.0
    %1394 = vmatpush1.msra.mxu0 0.0
    %1395 = vmatprep.mubr.f32.mxu0 0.0
    %1396 = vmatmul.mubr.f32.gmra.mrb[0].mxu0 %v1326
    %v1397 = vpop.f32.mrb[0].mxu0
    %v1398 = vadd.f32 %v1324, %v1397
    %v1399 = vpop.f32.mrb[0].mxu0
    %1400 = vmatprep.mubr.f32.mxu0 0.0
    %1401 = vmatmul.mubr.f32.gmra.mrb[0].mxu0 %v1329
    %v1402 = vpop.f32.mrb[0].mxu0
    %v1403 = vadd.f32 %v1324, %v1402
    %v1404 = vpop.f32.mrb[0].mxu0
    %1405 = vdwg.mxu0
    %v1406 = vlaneseq
    %v1407 = vshrl.u32 %v1406, 7
    %v1408 = vsub.s32 0, %v1407
    %v1409 = vrot.slane %v1255, %v1408
    %1410 = vmatprep.subr.mxu0 0.0
    %1411 = vmatpush1.msra.mxu0 %v1233
    %1412 = vmatprep.subr.mxu0 0.0
    %1413 = vmatpush1.msra.mxu0 %v1234
    %1414 = vmatprep.subr.mxu0 0.0
    %1415 = vmatpush1.msra.mxu0 %v1235
    %1416 = vmatprep.subr.mxu0 0.0
    %1417 = vmatpush1.msra.mxu0 %v1236
    %1418 = vmatprep.subr.mxu0 0.0
    %1419 = vmatpush1.msra.mxu0 0.0
    %1420 = vmatprep.subr.mxu0 0.0
    %1421 = vmatpush1.msra.mxu0 0.0
    %1422 = vmatprep.subr.mxu0 0.0
    %1423 = vmatpush1.msra.mxu0 0.0
    %1424 = vmatprep.subr.mxu0 0.0
    %1425 = vmatpush1.msra.mxu0 0.0
    %1426 = vmatprep.subr.mxu0 0.0
    %1427 = vmatpush1.msra.mxu0 0.0
    %1428 = vmatprep.subr.mxu0 0.0
    %1429 = vmatpush1.msra.mxu0 0.0
    %1430 = vmatprep.subr.mxu0 0.0
    %1431 = vmatpush1.msra.mxu0 0.0
    %1432 = vmatprep.subr.mxu0 0.0
    %1433 = vmatpush1.msra.mxu0 0.0
    %1434 = vmatprep.subr.mxu0 0.0
    %1435 = vmatpush1.msra.mxu0 0.0
    %1436 = vmatprep.subr.mxu0 0.0
    %1437 = vmatpush1.msra.mxu0 0.0
    %1438 = vmatprep.subr.mxu0 0.0
    %1439 = vmatpush1.msra.mxu0 0.0
    %1440 = vmatprep.subr.mxu0 0.0
    %1441 = vmatpush1.msra.mxu0 0.0
    %1442 = vmatprep.subr.mxu0 0.0
    %1443 = vmatpush1.msra.mxu0 0.0
    %1444 = vmatprep.subr.mxu0 0.0
    %1445 = vmatpush1.msra.mxu0 0.0
    %1446 = vmatprep.subr.mxu0 0.0
    %1447 = vmatpush1.msra.mxu0 0.0
    %1448 = vmatprep.subr.mxu0 0.0
    %1449 = vmatpush1.msra.mxu0 0.0
    %1450 = vmatprep.subr.mxu0 0.0
    %1451 = vmatpush1.msra.mxu0 0.0
    %1452 = vmatprep.subr.mxu0 0.0
    %1453 = vmatpush1.msra.mxu0 0.0
    %1454 = vmatprep.subr.mxu0 0.0
    %1455 = vmatpush1.msra.mxu0 0.0
    %1456 = vmatprep.subr.mxu0 0.0
    %1457 = vmatpush1.msra.mxu0 0.0
    %1458 = vmatprep.subr.mxu0 0.0
    %1459 = vmatpush1.msra.mxu0 0.0
    %1460 = vmatprep.subr.mxu0 0.0
    %1461 = vmatpush1.msra.mxu0 0.0
    %1462 = vmatprep.subr.mxu0 0.0
    %1463 = vmatpush1.msra.mxu0 0.0
    %1464 = vmatprep.subr.mxu0 0.0
    %1465 = vmatpush1.msra.mxu0 0.0
    %1466 = vmatprep.subr.mxu0 0.0
    %1467 = vmatpush1.msra.mxu0 0.0
    %1468 = vmatprep.subr.mxu0 0.0
    %1469 = vmatpush1.msra.mxu0 0.0
    %1470 = vmatprep.subr.mxu0 0.0
    %1471 = vmatpush1.msra.mxu0 0.0
    %1472 = vmatprep.subr.mxu0 0.0
    %1473 = vmatpush1.msra.mxu0 0.0
    %1474 = vmatprep.mubr.f32.mxu0 0.0
    %1475 = vmatmul.mubr.f32.gmra.mrb[0].mxu0 %v1326
    %v1476 = vpop.f32.mrb[0].mxu0
    %v1477 = vadd.f32 %v1409, %v1476
    %v1478 = vpop.f32.mrb[0].mxu0
    %1479 = vmatprep.mubr.f32.mxu0 0.0
    %1480 = vmatmul.mubr.f32.gmra.mrb[0].mxu0 %v1329
    %v1481 = vpop.f32.mrb[0].mxu0
    %v1482 = vadd.f32 %v1409, %v1481
    %v1483 = vpop.f32.mrb[0].mxu0
    %1484 = vdwg.mxu0
    %v1485 = vlaneseq
    %v1486 = vshrl.u32 %v1485, 7
    %v1487 = vsub.s32 0, %v1486
    %v1488 = vrot.slane %v1256, %v1487
    %1489 = vmatprep.subr.mxu0 0.0
    %1490 = vmatpush1.msra.mxu0 %v1237
    %1491 = vmatprep.subr.mxu0 0.0
    %1492 = vmatpush1.msra.mxu0 %v1238
    %1493 = vmatprep.subr.mxu0 0.0
    %1494 = vmatpush1.msra.mxu0 %v1239
    %1495 = vmatprep.subr.mxu0 0.0
    %1496 = vmatpush1.msra.mxu0 %v1240
    %1497 = vmatprep.subr.mxu0 0.0
    %1498 = vmatpush1.msra.mxu0 0.0
    %1499 = vmatprep.subr.mxu0 0.0
    %1500 = vmatpush1.msra.mxu0 0.0
    %1501 = vmatprep.subr.mxu0 0.0
    %1502 = vmatpush1.msra.mxu0 0.0
    %1503 = vmatprep.subr.mxu0 0.0
    %1504 = vmatpush1.msra.mxu0 0.0
    %1505 = vmatprep.subr.mxu0 0.0
    %1506 = vmatpush1.msra.mxu0 0.0
    %1507 = vmatprep.subr.mxu0 0.0
    %1508 = vmatpush1.msra.mxu0 0.0
    %1509 = vmatprep.subr.mxu0 0.0
    %1510 = vmatpush1.msra.mxu0 0.0
    %1511 = vmatprep.subr.mxu0 0.0
    %1512 = vmatpush1.msra.mxu0 0.0
    %1513 = vmatprep.subr.mxu0 0.0
    %1514 = vmatpush1.msra.mxu0 0.0
    %1515 = vmatprep.subr.mxu0 0.0
    %1516 = vmatpush1.msra.mxu0 0.0
    %1517 = vmatprep.subr.mxu0 0.0
    %1518 = vmatpush1.msra.mxu0 0.0
    %1519 = vmatprep.subr.mxu0 0.0
    %1520 = vmatpush1.msra.mxu0 0.0
    %1521 = vmatprep.subr.mxu0 0.0
    %1522 = vmatpush1.msra.mxu0 0.0
    %1523 = vmatprep.subr.mxu0 0.0
    %1524 = vmatpush1.msra.mxu0 0.0
    %1525 = vmatprep.subr.mxu0 0.0
    %1526 = vmatpush1.msra.mxu0 0.0
    %1527 = vmatprep.subr.mxu0 0.0
    %1528 = vmatpush1.msra.mxu0 0.0
    %1529 = vmatprep.subr.mxu0 0.0
    %1530 = vmatpush1.msra.mxu0 0.0
    %1531 = vmatprep.subr.mxu0 0.0
    %1532 = vmatpush1.msra.mxu0 0.0
    %1533 = vmatprep.subr.mxu0 0.0
    %1534 = vmatpush1.msra.mxu0 0.0
    %1535 = vmatprep.subr.mxu0 0.0
    %1536 = vmatpush1.msra.mxu0 0.0
    %1537 = vmatprep.subr.mxu0 0.0
    %1538 = vmatpush1.msra.mxu0 0.0
    %1539 = vmatprep.subr.mxu0 0.0
    %1540 = vmatpush1.msra.mxu0 0.0
    %1541 = vmatprep.subr.mxu0 0.0
    %1542 = vmatpush1.msra.mxu0 0.0
    %1543 = vmatprep.subr.mxu0 0.0
    %1544 = vmatpush1.msra.mxu0 0.0
    %1545 = vmatprep.subr.mxu0 0.0
    %1546 = vmatpush1.msra.mxu0 0.0
    %1547 = vmatprep.subr.mxu0 0.0
    %1548 = vmatpush1.msra.mxu0 0.0
    %1549 = vmatprep.subr.mxu0 0.0
    %1550 = vmatpush1.msra.mxu0 0.0
    %1551 = vmatprep.subr.mxu0 0.0
    %1552 = vmatpush1.msra.mxu0 0.0
    %1553 = vmatprep.mubr.f32.mxu0 0.0
    %1554 = vmatmul.mubr.f32.gmra.mrb[0].mxu0 %v1326
    %v1555 = vpop.f32.mrb[0].mxu0
    %v1556 = vadd.f32 %v1488, %v1555
    %v1557 = vpop.f32.mrb[0].mxu0
    %1558 = vmatprep.mubr.f32.mxu0 0.0
    %1559 = vmatmul.mubr.f32.gmra.mrb[0].mxu0 %v1329
    %v1560 = vpop.f32.mrb[0].mxu0
    %v1561 = vadd.f32 %v1488, %v1560
    %v1562 = vpop.f32.mrb[0].mxu0
    %1563 = vdwg.mxu0
    %v1564 = vsel %vm510, %v1398, 0.0
    %v1565 = vsel %vm510, %v1403, 0.0
    %v1567 = vsel %vm206, %v1564, 0
    %v1570 = vsel %vm206, %v1565, 0
    %v1573 = vsel %vm206, %v1477, 0
    %v1576 = vsel %vm206, %v1482, 0
    %1578 = vmatprep.subr.mxu0 0.0
    %1579 = vmatpush1.xpose.msra.mxu0 %v1573
    %1580 = vmatprep.subr.mxu0 0.0
    %1581 = vmatpush1.xpose.msra.mxu0 %v1576
    %1582 = vmatprep.subr.mxu0 0.0
    %1583 = vmatpush1.xpose.msra.mxu0 0.0
    %1584 = vmatprep.subr.mxu0 0.0
    %1585 = vmatpush1.xpose.msra.mxu0 0.0
    %1586 = vmatprep.subr.mxu0 0.0
    %1587 = vmatpush1.xpose.msra.mxu0 0.0
    %1588 = vmatprep.subr.mxu0 0.0
    %1589 = vmatpush1.xpose.msra.mxu0 0.0
    %1590 = vmatprep.subr.mxu0 0.0
    %1591 = vmatpush1.xpose.msra.mxu0 0.0
    %1592 = vmatprep.subr.mxu0 0.0
    %1593 = vmatpush1.xpose.msra.mxu0 0.0
    %1594 = vmatprep.subr.mxu0 0.0
    %1595 = vmatpush1.xpose.msra.mxu0 0.0
    %1596 = vmatprep.subr.mxu0 0.0
    %1597 = vmatpush1.xpose.msra.mxu0 0.0
    %1598 = vmatprep.subr.mxu0 0.0
    %1599 = vmatpush1.xpose.msra.mxu0 0.0
    %1600 = vmatprep.subr.mxu0 0.0
    %1601 = vmatpush1.xpose.msra.mxu0 0.0
    %1602 = vmatprep.subr.mxu0 0.0
    %1603 = vmatpush1.xpose.msra.mxu0 0.0
    %1604 = vmatprep.subr.mxu0 0.0
    %1605 = vmatpush1.xpose.msra.mxu0 0.0
    %1606 = vmatprep.subr.mxu0 0.0
    %1607 = vmatpush1.xpose.msra.mxu0 0.0
    %1608 = vmatprep.subr.mxu0 0.0
    %1609 = vmatpush1.xpose.msra.mxu0 0.0
    %1610 = vmatprep.subr.mxu0 0.0
    %1611 = vmatpush1.xpose.msra.mxu0 0.0
    %1612 = vmatprep.subr.mxu0 0.0
    %1613 = vmatpush1.xpose.msra.mxu0 0.0
    %1614 = vmatprep.subr.mxu0 0.0
    %1615 = vmatpush1.xpose.msra.mxu0 0.0
    %1616 = vmatprep.subr.mxu0 0.0
    %1617 = vmatpush1.xpose.msra.mxu0 0.0
    %1618 = vmatprep.subr.mxu0 0.0
    %1619 = vmatpush1.xpose.msra.mxu0 0.0
    %1620 = vmatprep.subr.mxu0 0.0
    %1621 = vmatpush1.xpose.msra.mxu0 0.0
    %1622 = vmatprep.subr.mxu0 0.0
    %1623 = vmatpush1.xpose.msra.mxu0 0.0
    %1624 = vmatprep.subr.mxu0 0.0
    %1625 = vmatpush1.xpose.msra.mxu0 0.0
    %1626 = vmatprep.subr.mxu0 0.0
    %1627 = vmatpush1.xpose.msra.mxu0 0.0
    %1628 = vmatprep.subr.mxu0 0.0
    %1629 = vmatpush1.xpose.msra.mxu0 0.0
    %1630 = vmatprep.subr.mxu0 0.0
    %1631 = vmatpush1.xpose.msra.mxu0 0.0
    %1632 = vmatprep.subr.mxu0 0.0
    %1633 = vmatpush1.xpose.msra.mxu0 0.0
    %1634 = vmatprep.subr.mxu0 0.0
    %1635 = vmatpush1.xpose.msra.mxu0 0.0
    %1636 = vmatprep.subr.mxu0 0.0
    %1637 = vmatpush1.xpose.msra.mxu0 0.0
    %1638 = vmatprep.subr.mxu0 0.0
    %1639 = vmatpush1.xpose.msra.mxu0 0.0
    %1640 = vmatprep.subr.mxu0 0.0
    %1641 = vmatpush1.xpose.msra.mxu0 0.0
    %1642 = vmatprep.mubr.f32.mxu0 0.0
    %1643 = vmatmul.mubr.f32.gmra.mrb[0].mxu0 %v1567
    %v1644 = vpop.f32.mrb[0].mxu0
    %v1645 = vadd.f32 %v164, %v1644
    %v1646 = vpop.f32.mrb[0].mxu0
    %1647 = vmatprep.mubr.f32.mxu0 0.0
    %1648 = vmatmul.mubr.f32.gmra.mrb[0].mxu0 %v1570
    %v1649 = vpop.f32.mrb[0].mxu0
    %v1650 = vadd.f32 %v165, %v1649
    %v1651 = vpop.f32.mrb[0].mxu0
    %1652 = vdwg.mxu0
    %v1653 = vmul.f32 %v1645, 1.442695
    %v1654 = vpow.pop %v1653
    %v1655 = vmul.f32 %v1650, 1.442695
    %v1656 = vpow.pop %v1655
    %v1657 = vsel %vm604, %v1654, 0.0
    %1658 = vadd.xlane.f32.xlu0 %v1657
    %v1659 = vpop.xlane.xlu0 %1658
    %v1660 = vsel %vm604, %v1656, 0.0
    %1661 = vadd.xlane.f32.xlu0 %v1660
    %v1662 = vpop.xlane.xlu0 %1661
    %v1663 = vadd.f32 %v1659, 1e-09
    %v1664 = vadd.f32 %v1662, 1e-09
    %v1665 = vrcp.pop %v1663
    %v1666 = vrcp.pop %v1664
    %v1667 = vmul.f32 %v1663, %v1665
    %v1668 = vmul.f32 %v1664, %v1666
    %v1669 = vsub.f32 2.0, %v1667
    %v1670 = vsub.f32 2.0, %v1668
    %v1671 = vmul.f32 %v1665, %v1669
    %v1672 = vmul.f32 %v1666, %v1670
    %v1673 = vmul.f32 %v1654, %v1671
    %v1674 = vmul.f32 %v1656, %v1672
    %v1675 = vsel %vm510, %v1556, 0.0
    %v1676 = vsel %vm510, %v1561, 0.0
    %v1677 = vsel %vm626, %v1398, 0.0
    %v1678 = vsel %vm626, %v1403, 0.0
    %v1680 = vsel %vm206, %v1677, 0
    %v1683 = vsel %vm206, %v1678, 0
    %1685 = vmatprep.subr.mxu0 0.0
    %1686 = vmatpush1.xpose.msra.mxu0 %v1573
    %1687 = vmatprep.subr.mxu0 0.0
    %1688 = vmatpush1.xpose.msra.mxu0 %v1576
    %1689 = vmatprep.subr.mxu0 0.0
    %1690 = vmatpush1.xpose.msra.mxu0 0.0
    %1691 = vmatprep.subr.mxu0 0.0
    %1692 = vmatpush1.xpose.msra.mxu0 0.0
    %1693 = vmatprep.subr.mxu0 0.0
    %1694 = vmatpush1.xpose.msra.mxu0 0.0
    %1695 = vmatprep.subr.mxu0 0.0
    %1696 = vmatpush1.xpose.msra.mxu0 0.0
    %1697 = vmatprep.subr.mxu0 0.0
    %1698 = vmatpush1.xpose.msra.mxu0 0.0
    %1699 = vmatprep.subr.mxu0 0.0
    %1700 = vmatpush1.xpose.msra.mxu0 0.0
    %1701 = vmatprep.subr.mxu0 0.0
    %1702 = vmatpush1.xpose.msra.mxu0 0.0
    %1703 = vmatprep.subr.mxu0 0.0
    %1704 = vmatpush1.xpose.msra.mxu0 0.0
    %1705 = vmatprep.subr.mxu0 0.0
    %1706 = vmatpush1.xpose.msra.mxu0 0.0
    %1707 = vmatprep.subr.mxu0 0.0
    %1708 = vmatpush1.xpose.msra.mxu0 0.0
    %1709 = vmatprep.subr.mxu0 0.0
    %1710 = vmatpush1.xpose.msra.mxu0 0.0
    %1711 = vmatprep.subr.mxu0 0.0
    %1712 = vmatpush1.xpose.msra.mxu0 0.0
    %1713 = vmatprep.subr.mxu0 0.0
    %1714 = vmatpush1.xpose.msra.mxu0 0.0
    %1715 = vmatprep.subr.mxu0 0.0
    %1716 = vmatpush1.xpose.msra.mxu0 0.0
    %1717 = vmatprep.subr.mxu0 0.0
    %1718 = vmatpush1.xpose.msra.mxu0 0.0
    %1719 = vmatprep.subr.mxu0 0.0
    %1720 = vmatpush1.xpose.msra.mxu0 0.0
    %1721 = vmatprep.subr.mxu0 0.0
    %1722 = vmatpush1.xpose.msra.mxu0 0.0
    %1723 = vmatprep.subr.mxu0 0.0
    %1724 = vmatpush1.xpose.msra.mxu0 0.0
    %1725 = vmatprep.subr.mxu0 0.0
    %1726 = vmatpush1.xpose.msra.mxu0 0.0
    %1727 = vmatprep.subr.mxu0 0.0
    %1728 = vmatpush1.xpose.msra.mxu0 0.0
    %1729 = vmatprep.subr.mxu0 0.0
    %1730 = vmatpush1.xpose.msra.mxu0 0.0
    %1731 = vmatprep.subr.mxu0 0.0
    %1732 = vmatpush1.xpose.msra.mxu0 0.0
    %1733 = vmatprep.subr.mxu0 0.0
    %1734 = vmatpush1.xpose.msra.mxu0 0.0
    %1735 = vmatprep.subr.mxu0 0.0
    %1736 = vmatpush1.xpose.msra.mxu0 0.0
    %1737 = vmatprep.subr.mxu0 0.0
    %1738 = vmatpush1.xpose.msra.mxu0 0.0
    %1739 = vmatprep.subr.mxu0 0.0
    %1740 = vmatpush1.xpose.msra.mxu0 0.0
    %1741 = vmatprep.subr.mxu0 0.0
    %1742 = vmatpush1.xpose.msra.mxu0 0.0
    %1743 = vmatprep.subr.mxu0 0.0
    %1744 = vmatpush1.xpose.msra.mxu0 0.0
    %1745 = vmatprep.subr.mxu0 0.0
    %1746 = vmatpush1.xpose.msra.mxu0 0.0
    %1747 = vmatprep.subr.mxu0 0.0
    %1748 = vmatpush1.xpose.msra.mxu0 0.0
    %1749 = vmatprep.mubr.f32.mxu0 0.0
    %1750 = vmatmul.mubr.f32.gmra.mrb[0].mxu0 %v1680
    %v1751 = vpop.f32.mrb[0].mxu0
    %v1752 = vadd.f32 %v164, %v1751
    %v1753 = vpop.f32.mrb[0].mxu0
    %1754 = vmatprep.mubr.f32.mxu0 0.0
    %1755 = vmatmul.mubr.f32.gmra.mrb[0].mxu0 %v1683
    %v1756 = vpop.f32.mrb[0].mxu0
    %v1757 = vadd.f32 %v165, %v1756
    %v1758 = vpop.f32.mrb[0].mxu0
    %1759 = vdwg.mxu0
    %v1760 = vmul.f32 %v1752, 1.442695
    %v1761 = vpow.pop %v1760
    %v1762 = vmul.f32 %v1757, 1.442695
    %v1763 = vpow.pop %v1762
    %v1764 = vsel %vm604, %v1761, 0.0
    %1765 = vadd.xlane.f32.xlu0 %v1764
    %v1766 = vpop.xlane.xlu0 %1765
    %v1767 = vsel %vm604, %v1763, 0.0
    %1768 = vadd.xlane.f32.xlu0 %v1767
    %v1769 = vpop.xlane.xlu0 %1768
    %v1770 = vadd.f32 %v1766, 1e-09
    %v1771 = vadd.f32 %v1769, 1e-09
    %v1772 = vrcp.pop %v1770
    %v1773 = vrcp.pop %v1771
    %v1774 = vmul.f32 %v1770, %v1772
    %v1775 = vmul.f32 %v1771, %v1773
    %v1776 = vsub.f32 2.0, %v1774
    %v1777 = vsub.f32 2.0, %v1775
    %v1778 = vmul.f32 %v1772, %v1776
    %v1779 = vmul.f32 %v1773, %v1777
    %v1780 = vmul.f32 %v1761, %v1778
    %v1781 = vmul.f32 %v1763, %v1779
    %v1782 = vsel %vm626, %v1556, 0.0
    %v1783 = vsel %vm626, %v1561, 0.0
    %v1785 = vsel %vm604, %v1780, 0
    %v1788 = vsel %vm604, %v1781, 0
    %1790 = vmatprep.subr.mxu0 0.0
    %1791 = vmatpush1.msra.mxu0 %v1782
    %1792 = vmatprep.subr.mxu0 0.0
    %1793 = vmatpush1.msra.mxu0 %v1783
    %1794 = vmatprep.subr.mxu0 0.0
    %1795 = vmatpush1.msra.mxu0 0.0
    %1796 = vmatprep.subr.mxu0 0.0
    %1797 = vmatpush1.msra.mxu0 0.0
    %1798 = vmatprep.subr.mxu0 0.0
    %1799 = vmatpush1.msra.mxu0 0.0
    %1800 = vmatprep.subr.mxu0 0.0
    %1801 = vmatpush1.msra.mxu0 0.0
    %1802 = vmatprep.subr.mxu0 0.0
    %1803 = vmatpush1.msra.mxu0 0.0
    %1804 = vmatprep.subr.mxu0 0.0
    %1805 = vmatpush1.msra.mxu0 0.0
    %1806 = vmatprep.subr.mxu0 0.0
    %1807 = vmatpush1.msra.mxu0 0.0
    %1808 = vmatprep.subr.mxu0 0.0
    %1809 = vmatpush1.msra.mxu0 0.0
    %1810 = vmatprep.subr.mxu0 0.0
    %1811 = vmatpush1.msra.mxu0 0.0
    %1812 = vmatprep.subr.mxu0 0.0
    %1813 = vmatpush1.msra.mxu0 0.0
    %1814 = vmatprep.subr.mxu0 0.0
    %1815 = vmatpush1.msra.mxu0 0.0
    %1816 = vmatprep.subr.mxu0 0.0
    %1817 = vmatpush1.msra.mxu0 0.0
    %1818 = vmatprep.subr.mxu0 0.0
    %1819 = vmatpush1.msra.mxu0 0.0
    %1820 = vmatprep.subr.mxu0 0.0
    %1821 = vmatpush1.msra.mxu0 0.0
    %1822 = vmatprep.subr.mxu0 0.0
    %1823 = vmatpush1.msra.mxu0 0.0
    %1824 = vmatprep.subr.mxu0 0.0
    %1825 = vmatpush1.msra.mxu0 0.0
    %1826 = vmatprep.subr.mxu0 0.0
    %1827 = vmatpush1.msra.mxu0 0.0
    %1828 = vmatprep.subr.mxu0 0.0
    %1829 = vmatpush1.msra.mxu0 0.0
    %1830 = vmatprep.subr.mxu0 0.0
    %1831 = vmatpush1.msra.mxu0 0.0
    %1832 = vmatprep.subr.mxu0 0.0
    %1833 = vmatpush1.msra.mxu0 0.0
    %1834 = vmatprep.subr.mxu0 0.0
    %1835 = vmatpush1.msra.mxu0 0.0
    %1836 = vmatprep.subr.mxu0 0.0
    %1837 = vmatpush1.msra.mxu0 0.0
    %1838 = vmatprep.subr.mxu0 0.0
    %1839 = vmatpush1.msra.mxu0 0.0
    %1840 = vmatprep.subr.mxu0 0.0
    %1841 = vmatpush1.msra.mxu0 0.0
    %1842 = vmatprep.subr.mxu0 0.0
    %1843 = vmatpush1.msra.mxu0 0.0
    %1844 = vmatprep.subr.mxu0 0.0
    %1845 = vmatpush1.msra.mxu0 0.0
    %1846 = vmatprep.subr.mxu0 0.0
    %1847 = vmatpush1.msra.mxu0 0.0
    %1848 = vmatprep.subr.mxu0 0.0
    %1849 = vmatpush1.msra.mxu0 0.0
    %1850 = vmatprep.subr.mxu0 0.0
    %1851 = vmatpush1.msra.mxu0 0.0
    %1852 = vmatprep.subr.mxu0 0.0
    %1853 = vmatpush1.msra.mxu0 0.0
    %1854 = vmatprep.mubr.f32.mxu0 0.0
    %1855 = vmatmul.mubr.f32.gmra.mrb[0].mxu0 %v1785
    %v1856 = vpop.f32.mrb[0].mxu0
    %v1857 = vadd.f32 0.0, %v1856
    %v1858 = vpop.f32.mrb[0].mxu0
    %1859 = vmatprep.mubr.f32.mxu0 0.0
    %1860 = vmatmul.mubr.f32.gmra.mrb[0].mxu0 %v1788
    %v1861 = vpop.f32.mrb[0].mxu0
    %v1862 = vadd.f32 0.0, %v1861
    %v1863 = vpop.f32.mrb[0].mxu0
    %1864 = vdwg.mxu0
    %v1866 = vsel %vm604, %v1673, 0
    %v1869 = vsel %vm604, %v1674, 0
    %1871 = vmatprep.subr.mxu0 0.0
    %1872 = vmatpush1.msra.mxu0 %v1675
    %1873 = vmatprep.subr.mxu0 0.0
    %1874 = vmatpush1.msra.mxu0 %v1676
    %1875 = vmatprep.subr.mxu0 0.0
    %1876 = vmatpush1.msra.mxu0 0.0
    %1877 = vmatprep.subr.mxu0 0.0
    %1878 = vmatpush1.msra.mxu0 0.0
    %1879 = vmatprep.subr.mxu0 0.0
    %1880 = vmatpush1.msra.mxu0 0.0
    %1881 = vmatprep.subr.mxu0 0.0
    %1882 = vmatpush1.msra.mxu0 0.0
    %1883 = vmatprep.subr.mxu0 0.0
    %1884 = vmatpush1.msra.mxu0 0.0
    %1885 = vmatprep.subr.mxu0 0.0
    %1886 = vmatpush1.msra.mxu0 0.0
    %1887 = vmatprep.subr.mxu0 0.0
    %1888 = vmatpush1.msra.mxu0 0.0
    %1889 = vmatprep.subr.mxu0 0.0
    %1890 = vmatpush1.msra.mxu0 0.0
    %1891 = vmatprep.subr.mxu0 0.0
    %1892 = vmatpush1.msra.mxu0 0.0
    %1893 = vmatprep.subr.mxu0 0.0
    %1894 = vmatpush1.msra.mxu0 0.0
    %1895 = vmatprep.subr.mxu0 0.0
    %1896 = vmatpush1.msra.mxu0 0.0
    %1897 = vmatprep.subr.mxu0 0.0
    %1898 = vmatpush1.msra.mxu0 0.0
    %1899 = vmatprep.subr.mxu0 0.0
    %1900 = vmatpush1.msra.mxu0 0.0
    %1901 = vmatprep.subr.mxu0 0.0
    %1902 = vmatpush1.msra.mxu0 0.0
    %1903 = vmatprep.subr.mxu0 0.0
    %1904 = vmatpush1.msra.mxu0 0.0
    %1905 = vmatprep.subr.mxu0 0.0
    %1906 = vmatpush1.msra.mxu0 0.0
    %1907 = vmatprep.subr.mxu0 0.0
    %1908 = vmatpush1.msra.mxu0 0.0
    %1909 = vmatprep.subr.mxu0 0.0
    %1910 = vmatpush1.msra.mxu0 0.0
    %1911 = vmatprep.subr.mxu0 0.0
    %1912 = vmatpush1.msra.mxu0 0.0
    %1913 = vmatprep.subr.mxu0 0.0
    %1914 = vmatpush1.msra.mxu0 0.0
    %1915 = vmatprep.subr.mxu0 0.0
    %1916 = vmatpush1.msra.mxu0 0.0
    %1917 = vmatprep.subr.mxu0 0.0
    %1918 = vmatpush1.msra.mxu0 0.0
    %1919 = vmatprep.subr.mxu0 0.0
    %1920 = vmatpush1.msra.mxu0 0.0
    %1921 = vmatprep.subr.mxu0 0.0
    %1922 = vmatpush1.msra.mxu0 0.0
    %1923 = vmatprep.subr.mxu0 0.0
    %1924 = vmatpush1.msra.mxu0 0.0
    %1925 = vmatprep.subr.mxu0 0.0
    %1926 = vmatpush1.msra.mxu0 0.0
    %1927 = vmatprep.subr.mxu0 0.0
    %1928 = vmatpush1.msra.mxu0 0.0
    %1929 = vmatprep.subr.mxu0 0.0
    %1930 = vmatpush1.msra.mxu0 0.0
    %1931 = vmatprep.subr.mxu0 0.0
    %1932 = vmatpush1.msra.mxu0 0.0
    %1933 = vmatprep.subr.mxu0 0.0
    %1934 = vmatpush1.msra.mxu0 0.0
    %1935 = vmatprep.mubr.f32.mxu0 0.0
    %1936 = vmatmul.mubr.f32.gmra.mrb[0].mxu0 %v1866
    %v1937 = vpop.f32.mrb[0].mxu0
    %v1938 = vadd.f32 %v1857, %v1937
    %v1939 = vpop.f32.mrb[0].mxu0
    %1940 = vmatprep.mubr.f32.mxu0 0.0
    %1941 = vmatmul.mubr.f32.gmra.mrb[0].mxu0 %v1869
    %v1942 = vpop.f32.mrb[0].mxu0
    %v1943 = vadd.f32 %v1862, %v1942
    %v1944 = vpop.f32.mrb[0].mxu0
    %1945 = vdwg.mxu0
    %v1947 = vsel %vm206, %v1938, 0
    %v1950 = vsel %vm206, %v1943, 0
    %1952 = vmatprep.subr.mxu0 0.0
    %1953 = vmatpush1.msra.mxu0 %v1241
    %1954 = vmatprep.subr.mxu0 0.0
    %1955 = vmatpush1.msra.mxu0 %v1242
    %1956 = vmatprep.subr.mxu0 0.0
    %1957 = vmatpush1.msra.mxu0 %v1243
    %1958 = vmatprep.subr.mxu0 0.0
    %1959 = vmatpush1.msra.mxu0 %v1244
    %1960 = vmatprep.subr.mxu0 0.0
    %1961 = vmatpush1.msra.mxu0 0.0
    %1962 = vmatprep.subr.mxu0 0.0
    %1963 = vmatpush1.msra.mxu0 0.0
    %1964 = vmatprep.subr.mxu0 0.0
    %1965 = vmatpush1.msra.mxu0 0.0
    %1966 = vmatprep.subr.mxu0 0.0
    %1967 = vmatpush1.msra.mxu0 0.0
    %1968 = vmatprep.subr.mxu0 0.0
    %1969 = vmatpush1.msra.mxu0 0.0
    %1970 = vmatprep.subr.mxu0 0.0
    %1971 = vmatpush1.msra.mxu0 0.0
    %1972 = vmatprep.subr.mxu0 0.0
    %1973 = vmatpush1.msra.mxu0 0.0
    %1974 = vmatprep.subr.mxu0 0.0
    %1975 = vmatpush1.msra.mxu0 0.0
    %1976 = vmatprep.subr.mxu0 0.0
    %1977 = vmatpush1.msra.mxu0 0.0
    %1978 = vmatprep.subr.mxu0 0.0
    %1979 = vmatpush1.msra.mxu0 0.0
    %1980 = vmatprep.subr.mxu0 0.0
    %1981 = vmatpush1.msra.mxu0 0.0
    %1982 = vmatprep.subr.mxu0 0.0
    %1983 = vmatpush1.msra.mxu0 0.0
    %1984 = vmatprep.subr.mxu0 0.0
    %1985 = vmatpush1.msra.mxu0 0.0
    %1986 = vmatprep.subr.mxu0 0.0
    %1987 = vmatpush1.msra.mxu0 0.0
    %1988 = vmatprep.subr.mxu0 0.0
    %1989 = vmatpush1.msra.mxu0 0.0
    %1990 = vmatprep.subr.mxu0 0.0
    %1991 = vmatpush1.msra.mxu0 0.0
    %1992 = vmatprep.subr.mxu0 0.0
    %1993 = vmatpush1.msra.mxu0 0.0
    %1994 = vmatprep.subr.mxu0 0.0
    %1995 = vmatpush1.msra.mxu0 0.0
    %1996 = vmatprep.subr.mxu0 0.0
    %1997 = vmatpush1.msra.mxu0 0.0
    %1998 = vmatprep.subr.mxu0 0.0
    %1999 = vmatpush1.msra.mxu0 0.0
    %2000 = vmatprep.subr.mxu0 0.0
    %2001 = vmatpush1.msra.mxu0 0.0
    %2002 = vmatprep.subr.mxu0 0.0
    %2003 = vmatpush1.msra.mxu0 0.0
    %2004 = vmatprep.subr.mxu0 0.0
    %2005 = vmatpush1.msra.mxu0 0.0
    %2006 = vmatprep.subr.mxu0 0.0
    %2007 = vmatpush1.msra.mxu0 0.0
    %2008 = vmatprep.subr.mxu0 0.0
    %2009 = vmatpush1.msra.mxu0 0.0
    %2010 = vmatprep.subr.mxu0 0.0
    %2011 = vmatpush1.msra.mxu0 0.0
    %2012 = vmatprep.subr.mxu0 0.0
    %2013 = vmatpush1.msra.mxu0 0.0
    %2014 = vmatprep.subr.mxu0 0.0
    %2015 = vmatpush1.msra.mxu0 0.0
    %2016 = vmatprep.mubr.f32.mxu0 0.0
    %2017 = vmatmul.mubr.f32.gmra.mrb[0].mxu0 %v1947
    %v2018 = vpop.f32.mrb[0].mxu0
    %v2019 = vadd.f32 0.0, %v2018
    %v2020 = vpop.f32.mrb[0].mxu0
    %2021 = vmatprep.mubr.f32.mxu0 0.0
    %2022 = vmatmul.mubr.f32.gmra.mrb[0].mxu0 %v1950
    %v2023 = vpop.f32.mrb[0].mxu0
    %v2024 = vadd.f32 0.0, %v2023
    %v2025 = vpop.f32.mrb[0].mxu0
    %2026 = vdwg.mxu0
    %v2027 = vadd.f32 %v1227, %v2019
    %v2028 = vadd.f32 %v1228, %v2024
    %v2029 = vlaneseq
    %v2030 = vshrl.u32 %v2029, 7
    %v2031 = vsub.s32 0, %v2030
    %v2032 = vrot.slane %v1257, %v2031
    %v2033 = vadd.f32 %v2027, %v2032
    %v2034 = vadd.f32 %v2028, %v2032
    %v2035 = vsel %vm206, %v2033, 0.0
    %2036 = vadd.xlane.f32.xlu0 %v2035
    %v2037 = vpop.xlane.xlu0 %2036
    %v2038 = vsel %vm206, %v2034, 0.0
    %2039 = vadd.xlane.f32.xlu0 %v2038
    %v2040 = vpop.xlane.xlu0 %2039
    %v2041 = vmul.f32 %v2037, %v213
    %v2042 = vmul.f32 %v2040, %v213
    %v2043 = vsub.f32 %v2033, %v2041
    %v2044 = vsub.f32 %v2034, %v2042
    %v2045 = vmul.f32 %v2043, %v2043
    %v2046 = vmul.f32 %v2044, %v2044
    %v2047 = vsel %vm206, %v2045, 0.0
    %2048 = vadd.xlane.f32.xlu0 %v2047
    %v2049 = vpop.xlane.xlu0 %2048
    %v2050 = vsel %vm206, %v2046, 0.0
    %2051 = vadd.xlane.f32.xlu0 %v2050
    %v2052 = vpop.xlane.xlu0 %2051
    %v2053 = vmul.f32 %v2049, 0.032258064
    %v2054 = vmul.f32 %v2052, 0.032258064
    %v2055 = vlaneseq
    %v2056 = vshrl.u32 %v2055, 7
    %v2057 = vsub.s32 0, %v2056
    %v2058 = vrot.slane %v1261, %v2057
    %v2059 = vmul.f32 %v2058, %v2043
    %v2060 = vmul.f32 %v2058, %v2044
    %v2061 = vrsqrt.pop %v2053
    %v2062 = vmul.f32 %v2053, %v2061
    %vm2063 = vcmp.eq.f32.partialorder %v2053, inf
    %v2064 = vsel %vm2063, %v2053, %v2062
    %vm2065 = vcmp.eq.f32.partialorder %v2053, 0.0
    %v2066 = vand.u32 %v2053, 2147483648
    %v2067 = vsel %vm2065, %v2066, %v2064
    %v2068 = vrsqrt.pop %v2054
    %v2069 = vmul.f32 %v2054, %v2068
    %vm2070 = vcmp.eq.f32.partialorder %v2054, inf
    %v2071 = vsel %vm2070, %v2054, %v2069
    %vm2072 = vcmp.eq.f32.partialorder %v2054, 0.0
    %v2073 = vand.u32 %v2054, 2147483648
    %v2074 = vsel %vm2072, %v2073, %v2071
    %v2075 = vadd.f32 %v2067, 1e-06
    %v2076 = vadd.f32 %v2074, 1e-06
    %v2077 = vrcp.pop %v2075
    %v2078 = vrcp.pop %v2076
    %v2079 = vmul.f32 %v2075, %v2077
    %v2080 = vmul.f32 %v2076, %v2078
    %v2081 = vsub.f32 2.0, %v2079
    %v2082 = vsub.f32 2.0, %v2080
    %v2083 = vmul.f32 %v2077, %v2081
    %v2084 = vmul.f32 %v2078, %v2082
    %v2085 = vmul.f32 %v2059, %v2083
    %v2086 = vmul.f32 %v2060, %v2084
    %v2087 = vlaneseq
    %v2088 = vshrl.u32 %v2087, 7
    %v2089 = vsub.s32 0, %v2088
    %v2090 = vrot.slane %v1262, %v2089
    %v2091 = vadd.f32 %v2085, %v2090
    %v2092 = vadd.f32 %v2086, %v2090
    %v2093 = vlaneseq
    %v2094 = vshrl.u32 %v2093, 7
    %v2095 = vsub.s32 0, %v2094
    %v2096 = vrot.slane %v1253, %v2095
    %v2098 = vsel %vm206, %v2091, 0
    %v2101 = vsel %vm206, %v2092, 0
    %2103 = vmatprep.subr.mxu0 0.0
    %2104 = vmatpush1.msra.mxu0 %v1245
    %2105 = vmatprep.subr.mxu0 0.0
    %2106 = vmatpush1.msra.mxu0 %v1246
    %2107 = vmatprep.subr.mxu0 0.0
    %2108 = vmatpush1.msra.mxu0 %v1247
    %2109 = vmatprep.subr.mxu0 0.0
    %2110 = vmatpush1.msra.mxu0 %v1248
    %2111 = vmatprep.subr.mxu0 0.0
    %2112 = vmatpush1.msra.mxu0 0.0
    %2113 = vmatprep.subr.mxu0 0.0
    %2114 = vmatpush1.msra.mxu0 0.0
    %2115 = vmatprep.subr.mxu0 0.0
    %2116 = vmatpush1.msra.mxu0 0.0
    %2117 = vmatprep.subr.mxu0 0.0
    %2118 = vmatpush1.msra.mxu0 0.0
    %2119 = vmatprep.subr.mxu0 0.0
    %2120 = vmatpush1.msra.mxu0 0.0
    %2121 = vmatprep.subr.mxu0 0.0
    %2122 = vmatpush1.msra.mxu0 0.0
    %2123 = vmatprep.subr.mxu0 0.0
    %2124 = vmatpush1.msra.mxu0 0.0
    %2125 = vmatprep.subr.mxu0 0.0
    %2126 = vmatpush1.msra.mxu0 0.0
    %2127 = vmatprep.subr.mxu0 0.0
    %2128 = vmatpush1.msra.mxu0 0.0
    %2129 = vmatprep.subr.mxu0 0.0
    %2130 = vmatpush1.msra.mxu0 0.0
    %2131 = vmatprep.subr.mxu0 0.0
    %2132 = vmatpush1.msra.mxu0 0.0
    %2133 = vmatprep.subr.mxu0 0.0
    %2134 = vmatpush1.msra.mxu0 0.0
    %2135 = vmatprep.subr.mxu0 0.0
    %2136 = vmatpush1.msra.mxu0 0.0
    %2137 = vmatprep.subr.mxu0 0.0
    %2138 = vmatpush1.msra.mxu0 0.0
    %2139 = vmatprep.subr.mxu0 0.0
    %2140 = vmatpush1.msra.mxu0 0.0
    %2141 = vmatprep.subr.mxu0 0.0
    %2142 = vmatpush1.msra.mxu0 0.0
    %2143 = vmatprep.subr.mxu0 0.0
    %2144 = vmatpush1.msra.mxu0 0.0
    %2145 = vmatprep.subr.mxu0 0.0
    %2146 = vmatpush1.msra.mxu0 0.0
    %2147 = vmatprep.subr.mxu0 0.0
    %2148 = vmatpush1.msra.mxu0 0.0
    %2149 = vmatprep.subr.mxu0 0.0
    %2150 = vmatpush1.msra.mxu0 0.0
    %2151 = vmatprep.subr.mxu0 0.0
    %2152 = vmatpush1.msra.mxu0 0.0
    %2153 = vmatprep.subr.mxu0 0.0
    %2154 = vmatpush1.msra.mxu0 0.0
    %2155 = vmatprep.subr.mxu0 0.0
    %2156 = vmatpush1.msra.mxu0 0.0
    %2157 = vmatprep.subr.mxu0 0.0
    %2158 = vmatpush1.msra.mxu0 0.0
    %2159 = vmatprep.subr.mxu0 0.0
    %2160 = vmatpush1.msra.mxu0 0.0
    %2161 = vmatprep.subr.mxu0 0.0
    %2162 = vmatpush1.msra.mxu0 0.0
    %2163 = vmatprep.subr.mxu0 0.0
    %2164 = vmatpush1.msra.mxu0 0.0
    %2165 = vmatprep.subr.mxu0 0.0
    %2166 = vmatpush1.msra.mxu0 0.0
    %2167 = vmatprep.mubr.f32.mxu0 0.0
    %2168 = vmatmul.mubr.f32.gmra.mrb[0].mxu0 %v2098
    %v2169 = vpop.f32.mrb[0].mxu0
    %v2170 = vadd.f32 %v2096, %v2169
    %v2171 = vpop.f32.mrb[0].mxu0
    %2172 = vmatprep.mubr.f32.mxu0 0.0
    %2173 = vmatmul.mubr.f32.gmra.mrb[0].mxu0 %v2101
    %v2174 = vpop.f32.mrb[0].mxu0
    %v2175 = vadd.f32 %v2096, %v2174
    %v2176 = vpop.f32.mrb[0].mxu0
    %2177 = vdwg.mxu0
    %v2178 = vmul.f32 %v2170, 0.5
    %v2179 = vmul.f32 %v2175, 0.5
    %v2180 = vmul.f32 %v2170, 0.044715
    %v2181 = vmul.f32 %v2175, 0.044715
    %v2182 = vmul.f32 %v2180, %v2170
    %v2183 = vmul.f32 %v2181, %v2175
    %v2184 = vmul.f32 %v2182, %v2170
    %v2185 = vmul.f32 %v2183, %v2175
    %v2186 = vadd.f32 %v2170, %v2184
    %v2187 = vadd.f32 %v2175, %v2185
    %v2188 = vmul.f32 %v2186, 0.7978846
    %v2189 = vmul.f32 %v2187, 0.7978846
    %v2190 = vtanh.pop %v2188
    %v2191 = vtanh.pop %v2189
    %v2192 = vadd.f32 %v2190, 1.0
    %v2193 = vadd.f32 %v2191, 1.0
    %v2194 = vmul.f32 %v2178, %v2192
    %v2195 = vmul.f32 %v2179, %v2193
    %2196 = vmatprep.subr.mxu0 0.0
    %2197 = vmatpush1.xpose.msra.mxu0 %v1249
    %2198 = vmatprep.subr.mxu0 0.0
    %2199 = vmatpush1.xpose.msra.mxu0 %v1250
    %2200 = vmatprep.subr.mxu0 0.0
    %2201 = vmatpush1.xpose.msra.mxu0 %v1251
    %2202 = vmatprep.subr.mxu0 0.0
    %2203 = vmatpush1.xpose.msra.mxu0 %v1252
    %2204 = vmatprep.subr.mxu0 0.0
    %2205 = vmatpush1.xpose.msra.mxu0 0.0
    %2206 = vmatprep.subr.mxu0 0.0
    %2207 = vmatpush1.xpose.msra.mxu0 0.0
    %2208 = vmatprep.subr.mxu0 0.0
    %2209 = vmatpush1.xpose.msra.mxu0 0.0
    %2210 = vmatprep.subr.mxu0 0.0
    %2211 = vmatpush1.xpose.msra.mxu0 0.0
    %2212 = vmatprep.subr.mxu0 0.0
    %2213 = vmatpush1.xpose.msra.mxu0 0.0
    %2214 = vmatprep.subr.mxu0 0.0
    %2215 = vmatpush1.xpose.msra.mxu0 0.0
    %2216 = vmatprep.subr.mxu0 0.0
    %2217 = vmatpush1.xpose.msra.mxu0 0.0
    %2218 = vmatprep.subr.mxu0 0.0
    %2219 = vmatpush1.xpose.msra.mxu0 0.0
    %2220 = vmatprep.subr.mxu0 0.0
    %2221 = vmatpush1.xpose.msra.mxu0 0.0
    %2222 = vmatprep.subr.mxu0 0.0
    %2223 = vmatpush1.xpose.msra.mxu0 0.0
    %2224 = vmatprep.subr.mxu0 0.0
    %2225 = vmatpush1.xpose.msra.mxu0 0.0
    %2226 = vmatprep.subr.mxu0 0.0
    %2227 = vmatpush1.xpose.msra.mxu0 0.0
    %2228 = vmatprep.subr.mxu0 0.0
    %2229 = vmatpush1.xpose.msra.mxu0 0.0
    %2230 = vmatprep.subr.mxu0 0.0
    %2231 = vmatpush1.xpose.msra.mxu0 0.0
    %2232 = vmatprep.subr.mxu0 0.0
    %2233 = vmatpush1.xpose.msra.mxu0 0.0
    %2234 = vmatprep.subr.mxu0 0.0
    %2235 = vmatpush1.xpose.msra.mxu0 0.0
    %2236 = vmatprep.subr.mxu0 0.0
    %2237 = vmatpush1.xpose.msra.mxu0 0.0
    %2238 = vmatprep.subr.mxu0 0.0
    %2239 = vmatpush1.xpose.msra.mxu0 0.0
    %2240 = vmatprep.subr.mxu0 0.0
    %2241 = vmatpush1.xpose.msra.mxu0 0.0
    %2242 = vmatprep.subr.mxu0 0.0
    %2243 = vmatpush1.xpose.msra.mxu0 0.0
    %2244 = vmatprep.subr.mxu0 0.0
    %2245 = vmatpush1.xpose.msra.mxu0 0.0
    %2246 = vmatprep.subr.mxu0 0.0
    %2247 = vmatpush1.xpose.msra.mxu0 0.0
    %2248 = vmatprep.subr.mxu0 0.0
    %2249 = vmatpush1.xpose.msra.mxu0 0.0
    %2250 = vmatprep.subr.mxu0 0.0
    %2251 = vmatpush1.xpose.msra.mxu0 0.0
    %2252 = vmatprep.subr.mxu0 0.0
    %2253 = vmatpush1.xpose.msra.mxu0 0.0
    %2254 = vmatprep.subr.mxu0 0.0
    %2255 = vmatpush1.xpose.msra.mxu0 0.0
    %2256 = vmatprep.subr.mxu0 0.0
    %2257 = vmatpush1.xpose.msra.mxu0 0.0
    %2258 = vmatprep.subr.mxu0 0.0
    %2259 = vmatpush1.xpose.msra.mxu0 0.0
    %2260 = vmatprep.mubr.f32.mxu0 0.0
    %2261 = vmatmul.mubr.f32.gmra.mrb[0].mxu0 %v2194
    %v2262 = vpop.f32.mrb[0].mxu0
    %v2263 = vadd.f32 0.0, %v2262
    %v2264 = vpop.f32.mrb[0].mxu0
    %2265 = vmatprep.mubr.f32.mxu0 0.0
    %2266 = vmatmul.mubr.f32.gmra.mrb[0].mxu0 %v2195
    %v2267 = vpop.f32.mrb[0].mxu0
    %v2268 = vadd.f32 0.0, %v2267
    %v2269 = vpop.f32.mrb[0].mxu0
    %2270 = vdwg.mxu0
    %v2271 = vadd.f32 %v2033, %v2263
    %v2272 = vadd.f32 %v2034, %v2268
    %v2273 = vlaneseq
    %v2274 = vshrl.u32 %v2273, 7
    %v2275 = vsub.s32 0, %v2274
    %v2276 = vrot.slane %v1260, %v2275
    %v2277 = vadd.f32 %v2271, %v2276
    %v2278 = vadd.f32 %v2272, %v2276
    %2279 = vst.msk [vmem:[#allocation2] sm:$0xff] %vm206, %v2277
    %2280 = vst.msk [vmem:[#allocation2 + $0x8] sm:$0xff] %vm206, %v2278
    // Predicated region
    $region30: #{bert_forward.1} parent=1 // pred_check
      _
    $region31: #{bert_forward.1} parent=1 // pred_check_branch
      %2282 = sbr.rel (0) target = $region33
    $region32: #{bert_forward.1} parent=1 // pred_region
      %s2284 = ssub.s32 256, 256
      %2285 = vsyncadd [#allocation3], %s2284
      %s2286 = sshll.u32 [#allocation2], 4
      %s2287 = int_to_ptr.vmem [resolvable:$true] %s2286
      %2292 = dma.vmem_to_hbm [thread:$0]  %s2287, 256, %s7, [#allocation3], 128, 128, 8
    $region33: #{bert_forward.1} parent=1 // pred_fallthru
      _
    // Predicated region
    $region34: #{bert_forward.1} parent=1 // pred_check
      _
    $region35: #{bert_forward.1} parent=1 // pred_check_branch
      %2294 = sbr.rel (0) target = $region37
    $region36: #{bert_forward.1} parent=1 // pred_region
      %2295 = dma.done [#allocation3], 256
    $region37: #{bert_forward.1} parent=1 // pred_fallthru
      _
    %2296 = vsyncpa [#allocation3], 1

</llo_original>
